<compile_context>
chip_gen: v5e
topology: v5e:2x2
jax: 0.10.0
libtpu: 0.0.40
codegen_flags: <defaults>
</compile_context>

<pallas_src>
import math
from functools import partial

import numpy as np
import jax
import jax.numpy as jnp
from jax.experimental import pallas as pl
from jax.experimental.pallas import tpu as pltpu


MAX_TILE_ROWS = 512          # default row tile cap (heavy-stream kernels)
MAX_TILE_ROWS_LIGHT = 1024   # row tile cap for the cheap hop-score streams
VMEM_STREAM_BUDGET = 24 << 20  # keep double-buffered row streams under ~24 MiB (v7x safe)
_PARALLEL = pltpu.CompilerParams(dimension_semantics=("parallel",))


# ----------------------------- Pallas kernels -----------------------------

def fused_proj_kernel(x_ref, w_ref, pe_ref,
                      src_ref, dst_ref, mid1_ref, mid2_ref, res_ref):
    # One wide bf16 matmul for [src|dst|mid1|mid2|res]; positional encoding is
    # folded into the bias row; the five projections are stored to five
    # separate output buffers (no XLA column-slice copies afterwards).
    acc = jnp.dot(x_ref[...], w_ref[...],
                  preferred_element_type=jnp.float32) + pe_ref[...]
    HD = src_ref.shape[1]
    src_ref[...] = acc[:, 0:HD]
    dst_ref[...] = acc[:, HD:2 * HD]
    mid1_ref[...] = acc[:, 2 * HD:3 * HD]
    mid2_ref[...] = acc[:, 3 * HD:4 * HD]
    res_ref[...] = acc[:, 4 * HD:5 * HD]


def hop_score_kernel(feat_ref, gfeat_ref, gw_ref, gb_ref, sel_ref, o_ref):
    # Fused geometry-linear (MXU) + LeakyReLU(0.2) + per-head attention
    # reduction with the attention vector folded into a lane-dense selector.
    #   feat:(T,HD)  gfeat:(T,GP)  gw:(GP,HD)  gb:(1,HD)  sel:(HD,128) -> o:(T,128)
    geom = jnp.dot(gfeat_ref[...], gw_ref[...],
                   preferred_element_type=jnp.float32) + gb_ref[...]
    z = feat_ref[...] * geom
    z = jnp.where(z >= 0, z, 0.2 * z)                       # LeakyReLU(0.2)
    o_ref[...] = jnp.dot(z, sel_ref[...], preferred_element_type=jnp.float32)


def combine_norm_kernel(zero_ref, eo_ref, ao_ref, do_ref, res_ref,
                        w1_ref, b1_ref, w2_ref, b2_ref, w3_ref, b3_ref,
                        sel_ref, selt_ref, bias_ref, gamma_ref, beta_ref,
                        alpha_ref, o_ref):
    # Fused: hop linears + axial attention combine + residual + bias
    #        + LayerNorm(eps=1e-5) + PReLU, one pass over a node row-tile.
    # 1/sqrt(D) is pre-folded into sel_ref; LN uses single-pass statistics.
    f32 = jnp.float32
    eo, ao, do_ = eo_ref[...], ao_ref[...], do_ref[...]

    one = jnp.dot(eo.astype(jnp.bfloat16), w1_ref[...],
                  preferred_element_type=f32) + b1_ref[...]
    two = jnp.dot(ao.astype(jnp.bfloat16), w2_ref[...],
                  preferred_element_type=f32) + b2_ref[...]
    three = jnp.dot(do_.astype(jnp.bfloat16), w3_ref[...],
                    preferred_element_type=f32) + b3_ref[...]

    z = zero_ref[...]
    sel = sel_ref[...]                                       # (HD,H), scale folded in
    s1 = jnp.dot(z * one, sel, preferred_element_type=f32)   # (T,H)
    s2 = jnp.dot(z * two, sel, preferred_element_type=f32)
    s3 = jnp.dot(z * three, sel, preferred_element_type=f32)
    m = jnp.maximum(jnp.maximum(s1, s2), s3)
    e1, e2, e3 = jnp.exp(s1 - m), jnp.exp(s2 - m), jnp.exp(s3 - m)
    inv = pl.reciprocal(e1 + e2 + e3, approx=True)           # EUP slot

    selt = selt_ref[...]
    w1a = jnp.dot(e1 * inv, selt, preferred_element_type=f32)  # (T,HD)
    w2a = jnp.dot(e2 * inv, selt, preferred_element_type=f32)
    w3a = jnp.dot(e3 * inv, selt, preferred_element_type=f32)

    y = w1a * eo + w2a * ao + w3a * do_ + res_ref[...] + bias_ref[...]
    mu = jnp.mean(y, axis=-1, keepdims=True)
    ms = jnp.mean(y * y, axis=-1, keepdims=True)             # single-pass stats
    yn = (y - mu) * jax.lax.rsqrt(ms - mu * mu + 1e-5)
    yn = yn * gamma_ref[...] + beta_ref[...]
    alpha = alpha_ref[0]
    o_ref[...] = jnp.where(yn >= 0, yn, alpha * yn)           # PReLU


# ----------------------------- pallas_call wrappers -----------------------------

def _round_up(n, m):
    return ((n + m - 1) // m) * m


def _row_tile(n, bytes_per_row=0, max_tile=MAX_TILE_ROWS,
              vmem_budget=VMEM_STREAM_BUDGET):
    """Row tile + padded row count; shrinks the tile when the double-buffered
    row streams would crowd VMEM (important on v7x's 64 MiB)."""
    n8 = _round_up(max(n, 1), 8)
    tile = min(max_tile, n8)
    while bytes_per_row and tile > 8 and tile * bytes_per_row > vmem_budget:
        tile = max(8, _round_up(tile // 2, 8))
    return tile, _round_up(n8, tile)


def _pad_idx(idx, rows):
    e = idx.shape[0]
    return idx if e == rows else jnp.pad(idx, (0, rows - e))   # pad with node 0


def _pad_2d(a, rows, cols):
    r, c = a.shape
    return jnp.pad(a, ((0, rows - r), (0, cols - c)))


def fused_projections(xp_bf16, w_proj, pe_bias, HD, tile):
    n_pad, F = xp_bf16.shape
    NOUT = w_proj.shape[1]                                     # 5 * HD
    row = pl.BlockSpec((tile, HD), lambda i: (i, 0))
    outs = pl.pallas_call(
        fused_proj_kernel,
        out_shape=tuple(jax.ShapeDtypeStruct((n_pad, HD), jnp.float32)
                        for _ in range(5)),
        grid=(n_pad // tile,),
        in_specs=[pl.BlockSpec((tile, F), lambda i: (i, 0)),
                  pl.BlockSpec((F, NOUT), lambda i: (0, 0)),
                  pl.BlockSpec((1, NOUT), lambda i: (0, 0))],
        out_specs=(row, row, row, row, row),
        compiler_params=_PARALLEL,
    )(xp_bf16, w_proj, pe_bias)
    return outs                                                # src, dst, mid1, mid2, res


def hop_scores(feat, gfeat, gw, gb, sel_attn, tile):
    e_pad, HD = feat.shape
    GP = gw.shape[0]
    HPAD = sel_attn.shape[1]                                   # lane-dense (>=128)
    return pl.pallas_call(
        hop_score_kernel,
        out_shape=jax.ShapeDtypeStruct((e_pad, HPAD), jnp.float32),
        grid=(e_pad // tile,),
        in_specs=[pl.BlockSpec((tile, HD), lambda i: (i, 0)),
                  pl.BlockSpec((tile, GP), lambda i: (i, 0)),
                  pl.BlockSpec((GP, HD), lambda i: (0, 0)),
                  pl.BlockSpec((1, HD), lambda i: (0, 0)),
                  pl.BlockSpec((HD, HPAD), lambda i: (0, 0))],
        out_specs=pl.BlockSpec((tile, HPAD), lambda i: (i, 0)),
        compiler_params=_PARALLEL,
    )(feat, gfeat, gw, gb, sel_attn)


def combine_norm(zero, edge_o, angle_o, dihedral_o, res, prep, tile):
    n_pad, HD = zero.shape
    H = prep['sel_comb'].shape[1]
    row = pl.BlockSpec((tile, HD), lambda i: (i, 0))

    def full(shape):
        return pl.BlockSpec(shape, lambda i: (0,) * len(shape))

    return pl.pallas_call(
        combine_norm_kernel,
        out_shape=jax.ShapeDtypeStruct((n_pad, HD), jnp.float32),
        grid=(n_pad // tile,),
        in_specs=[row] * 5 + [
            full((HD, HD)), full((1, HD)),
            full((HD, HD)), full((1, HD)),
            full((HD, HD)), full((1, HD)),
            full((HD, H)), full((H, HD)),
            full((1, HD)), full((1, HD)), full((1, HD)),
            pl.BlockSpec(memory_space=pltpu.MemorySpace.SMEM)],
        out_specs=row,
        compiler_params=_PARALLEL,
    )(zero, edge_o, angle_o, dihedral_o, res,
      prep['w_one'], prep['b_one'], prep['w_two'], prep['b_two'],
      prep['w_three'], prep['b_three'], prep['sel_comb'], prep['selt'],
      prep['bias'], prep['ln_gamma'], prep['ln_beta'], prep['prelu_alpha'])


# ----------------------------- JAX glue (geometry, gather/scatter) -----------------------------

def cal_distance(a, b):
    # TODO(synk): cal_distance not provided in source; standard Euclidean norm used.
    return jnp.sqrt(jnp.sum((a - b) ** 2, axis=-1) + 1e-12)


def cal_angle(src, mid, dst):
    # TODO(synk): cal_angle not provided in source; angle at `mid` used.
    v1 = src - mid
    v2 = dst - mid
    cosv = jnp.sum(v1 * v2, axis=-1) / (
        jnp.linalg.norm(v1, axis=-1) * jnp.linalg.norm(v2, axis=-1) + 1e-9)
    return jnp.arccos(jnp.clip(cosv, -1.0 + 1e-7, 1.0 - 1e-7))[:, None]


def cal_dihedral(p0, p1, p2, p3):
    # TODO(synk): cal_dihedral not provided in source; standard atan2 formula used.
    b0 = p0 - p1
    b1 = p2 - p1
    b2 = p3 - p2
    b1n = b1 / (jnp.linalg.norm(b1, axis=-1, keepdims=True) + 1e-9)
    v = b0 - jnp.sum(b0 * b1n, axis=-1, keepdims=True) * b1n
    w = b2 - jnp.sum(b2 * b1n, axis=-1, keepdims=True) * b1n
    xx = jnp.sum(v * w, axis=-1)
    yy = jnp.sum(jnp.cross(b1n, v) * w, axis=-1)
    return jnp.arctan2(yy, xx)[:, None]


def sinusoidal_pe(seq_len, d_model):
    # TODO(synk): PositionEncoder not provided in source; standard sinusoidal PE used.
    pos = jnp.arange(seq_len, dtype=jnp.float32)[:, None]
    i = jnp.arange(0, d_model, 2, dtype=jnp.float32)
    div = jnp.exp(-jnp.log(10000.0) * i / d_model)
    pe = jnp.zeros((seq_len, d_model), jnp.float32)
    pe = pe.at[:, 0::2].set(jnp.sin(pos * div))
    pe = pe.at[:, 1::2].set(jnp.cos(pos * div))
    return pe


def segment_softmax_aggregate(scores, dst_idx, messages, num_segments,
                              num_heads, head_dim):
    # TODO(synk): data-dependent scatter_add / gather kept in XLA (segment_sum);
    # global-max subtraction matches the torch spec's `attn - attn.max()`.
    # Rows padded in the wrapper carry -1e30 scores -> zero contribution.
    exp_s = jnp.exp(scores - jnp.max(scores))                        # (E, H)
    denom = jax.ops.segment_sum(exp_s, dst_idx, num_segments=num_segments)
    alpha = exp_s / (denom[dst_idx] + 1e-16)                         # (E, H)
    e = messages.shape[0]
    weighted = (messages.reshape(e, num_heads, head_dim) *
                alpha[:, :, None]).reshape(e, num_heads * head_dim)
    return jax.ops.segment_sum(weighted, dst_idx, num_segments=num_segments)


# ----------------------------- parameters -----------------------------

def init_params(key, num_node_features, num_heads, output_dim):
    F, H, D = num_node_features, num_heads, output_dim
    HD = H * D
    keys = jax.random.split(key, 24)

    def xav(k, shape, fi, fo):
        lim = math.sqrt(6.0 / (fi + fo))
        return jax.random.uniform(k, shape, jnp.float32, -lim, lim)

    p = {}
    p['W_src'] = xav(keys[0], (F, HD), F, HD)
    p['W_dst'] = xav(keys[1], (F, HD), F, HD)
    p['W_mid1'] = xav(keys[2], (F, HD), F, HD)
    p['W_mid2'] = xav(keys[3], (F, HD), F, HD)

    p['W_pos_bonded'] = xav(keys[4], (2, HD), 2, HD)
    p['b_pos_bonded'] = jnp.zeros((HD,), jnp.float32)
    p['W_pos_unbonded1'] = xav(keys[5], (3, HD), 3, HD)
    p['b_pos_unbonded1'] = jnp.zeros((HD,), jnp.float32)
    p['W_pos_unbonded2'] = xav(keys[6], (3, HD), 3, HD)
    p['b_pos_unbonded2'] = jnp.zeros((HD,), jnp.float32)
    p['W_angle'] = xav(keys[7], (2, HD), 2, HD)
    p['b_angle'] = jnp.zeros((HD,), jnp.float32)
    p['W_dihedral'] = xav(keys[8], (6, HD), 6, HD)
    p['b_dihedral'] = jnp.zeros((HD,), jnp.float32)

    p['W_one_hop'] = xav(keys[9], (HD, HD), HD, HD)
    p['b_one_hop'] = jnp.zeros((HD,), jnp.float32)
    p['W_two_hop'] = xav(keys[10], (HD, HD), HD, HD)
    p['b_two_hop'] = jnp.zeros((HD,), jnp.float32)
    p['W_three_hop'] = xav(keys[11], (HD, HD), HD, HD)
    p['b_three_hop'] = jnp.zeros((HD,), jnp.float32)

    p['double_attn'] = xav(keys[12], (1, H, D), H * D, D)
    p['triple_attn'] = xav(keys[13], (1, H, D), H * D, D)
    p['quadra_attn'] = xav(keys[14], (1, H, D), H * D, D)

    p['W_res'] = xav(keys[15], (F, HD), F, HD)

    p['bias'] = jnp.zeros((HD,), jnp.float32)
    p['ln_gamma'] = jnp.ones((HD,), jnp.float32)
    p['ln_beta'] = jnp.zeros((HD,), jnp.float32)
    p['prelu_alpha'] = jnp.array([0.25], jnp.float32)
    return p


def prepare_params(p, num_node_features, num_heads, output_dim):
    """One-time weight prep: fuse/concat/pad/transpose/bf16-cast off the hot path."""
    H, D = num_heads, output_dim
    HD = H * D
    pe = sinusoidal_pe(4, HD)                 # torch sequence order: src, mid2, mid1, dst
    prep = {}
    # fused projection weight [src|dst|mid1|mid2|res] and PE-as-bias
    prep['w_proj'] = jnp.concatenate(
        [p['W_src'], p['W_dst'], p['W_mid1'], p['W_mid2'], p['W_res']],
        axis=1).astype(jnp.bfloat16)
    prep['pe_bias'] = jnp.concatenate(
        [pe[0], pe[3], pe[2], pe[1], jnp.zeros((HD,), jnp.float32)]).reshape(1, 5 * HD)

    def pad_k(w):                              # pad contraction dim to multiple of 8 (MXU)
        g = w.shape[0]
        return jnp.pad(w, ((0, _round_up(g, 8) - g), (0, 0)))

    # per-hop fused geometry linears (concat order matches gfeat construction)
    prep['gw1'] = pad_k(p['W_pos_bonded'])
    prep['gb1'] = p['b_pos_bonded'].reshape(1, HD)
    prep['gw2'] = pad_k(jnp.concatenate([p['W_pos_unbonded1'], p['W_angle']], axis=0))
    prep['gb2'] = (p['b_pos_unbonded1'] + p['b_angle']).reshape(1, HD)
    prep['gw3'] = pad_k(jnp.concatenate([p['W_pos_unbonded2'], p['W_dihedral']], axis=0))
    prep['gb3'] = (p['b_pos_unbonded2'] + p['b_dihedral']).reshape(1, HD)

    # lane-dense head selectors with the attention vectors folded in:
    #   sel_attn_k[i, h] = attn_k[i] if i // D == h else 0, padded to >=128 lanes
    head_of_lane = jnp.arange(HD) // D
    HPAD = max(128, _round_up(H, 128))
    base128 = (head_of_lane[:, None] == jnp.arange(HPAD)[None, :]).astype(jnp.float32)
    prep['sel_attn1'] = base128 * p['double_attn'].reshape(HD)[:, None]
    prep['sel_attn2'] = base128 * p['triple_attn'].reshape(HD)[:, None]
    prep['sel_attn3'] = base128 * p['quadra_attn'].reshape(HD)[:, None]

    # combine-kernel selectors with the 1/sqrt(D) axial scale folded in
    sel = (head_of_lane[:, None] == jnp.arange(H)[None, :]).astype(jnp.float32)
    prep['sel_comb'] = sel / math.sqrt(D)
    prep['selt'] = sel.T

    # hop linears (bf16 weights for MXU)
    prep['w_one'] = p['W_one_hop'].astype(jnp.bfloat16)
    prep['b_one'] = p['b_one_hop'].reshape(1, HD)
    prep['w_two'] = p['W_two_hop'].astype(jnp.bfloat16)
    prep['b_two'] = p['b_two_hop'].reshape(1, HD)
    prep['w_three'] = p['W_three_hop'].astype(jnp.bfloat16)
    prep['b_three'] = p['b_three_hop'].reshape(1, HD)

    # bias + LayerNorm + PReLU
    prep['bias'] = p['bias'].reshape(1, HD)
    prep['ln_gamma'] = p['ln_gamma'].reshape(1, HD)
    prep['ln_beta'] = p['ln_beta'].reshape(1, HD)
    prep['prelu_alpha'] = p['prelu_alpha']          # (1,), lives in SMEM in-kernel
    return prep


# ----------------------------- forward -----------------------------

def ffi_layer_forward(prep, x, edge_index, triple_index, quadra_index, pos,
                      num_heads, output_dim):
    H, D = num_heads, output_dim
    HD = H * D
    N, F = x.shape

    # shared node-row tile (budget-aware: ~6 double-buffered f32 HD-wide streams)
    tile_n, n_pad = _row_tile(N, bytes_per_row=2 * 6 * HD * 4)
    xp = jnp.pad(x, ((0, n_pad - N), (0, 0))).astype(jnp.bfloat16)   # bf16 stream in

    # fused node projections (+PE), kept padded at n_pad rows end-to-end;
    # dropout == identity in eval mode
    src_p, dst_p, mid1_p, mid2_p, res_p = fused_projections(
        xp, prep['w_proj'], prep['pe_bias'], HD, tile_n)

    # TODO(synk): feature gathers (index_select) kept in XLA; moving them
    # in-kernel via PrefetchScalarGridSpec row-gather is a further optimization.

    def hop(src_idx_list, dst_idx, msg_proj, extra_gathers, gfeat_raw,
            gw, gb, sel_attn, hd_bytes):
        e = dst_idx.shape[0]
        tile_e, e_pad = _row_tile(e, bytes_per_row=hd_bytes,
                                  max_tile=MAX_TILE_ROWS_LIGHT)
        dst_pad = _pad_idx(dst_idx, e_pad)
        msg = msg_proj[_pad_idx(src_idx_list, e_pad)]                # (e_pad, HD) gather
        feat = msg
        for proj, idx in extra_gathers:
            feat = feat + proj[_pad_idx(idx, e_pad)]
        gfeat = _pad_2d(gfeat_raw, e_pad, gw.shape[0])               # tiny zero-pad
        score = hop_scores(feat, gfeat, gw, gb, sel_attn, tile_e)    # (e_pad, >=128)
        score = jnp.where(jnp.arange(e_pad)[:, None] < e,
                          score[:, :H], -1e30)                       # mask padded rows
        return segment_softmax_aggregate(score, dst_pad, msg, n_pad, H, D)

    hd_bytes = 2 * (HD + 128 + 16) * 4

    # ---- one-hop (edges) ----
    # TODO(synk): edge_attr masking branch not implemented; edge_attr=None path only.
    e_src, e_dst = edge_index[0], edge_index[1]
    d_e = cal_distance(pos[e_src], pos[e_dst])[:, None]
    gfeat_e = jnp.concatenate([d_e, d_e ** 2], axis=1)                       # (E,2)
    edge_output = hop(e_src, e_dst, mid1_p, [(dst_p, e_dst)], gfeat_e,
                      prep['gw1'], prep['gb1'], prep['sel_attn1'], hd_bytes)

    # ---- two-hop (angles) ----
    a_src, a_mid, a_dst = triple_index[0], triple_index[1], triple_index[2]
    d_a = cal_distance(pos[a_src], pos[a_dst])[:, None]
    ang = cal_angle(pos[a_src], pos[a_mid], pos[a_dst])
    gfeat_a = jnp.concatenate([d_a ** (-6), d_a ** (-12), d_a ** (-1),
                               ang, ang ** 2], axis=1)                       # (T,5)
    angle_output = hop(a_src, a_dst, mid2_p, [(dst_p, a_dst), (mid1_p, a_mid)],
                       gfeat_a, prep['gw2'], prep['gb2'], prep['sel_attn2'],
                       hd_bytes)

    # ---- three-hop (dihedrals) ----
    q_src, q_mid2, q_mid1, q_dst = (quadra_index[0], quadra_index[1],
                                    quadra_index[2], quadra_index[3])
    d_q = cal_distance(pos[q_src], pos[q_dst])[:, None]
    phi = cal_dihedral(pos[q_src], pos[q_mid2], pos[q_mid1], pos[q_dst])
    gfeat_q = jnp.concatenate([d_q ** (-6), d_q ** (-12), d_q ** (-1),
                               jnp.cos(phi), jnp.cos(2 * phi), jnp.cos(3 * phi),
                               jnp.sin(phi), jnp.sin(2 * phi), jnp.sin(3 * phi)],
                              axis=1)                                        # (Q,9)
    dihedral_output = hop(q_src, q_dst, src_p,
                          [(dst_p, q_dst), (mid1_p, q_mid1), (mid2_p, q_mid2)],
                          gfeat_q, prep['gw3'], prep['gb3'], prep['sel_attn3'],
                          hd_bytes)

    # ---- fused hop-linears + axial attention + residual + bias + LN + PReLU ----
    out = combine_norm(dst_p, edge_output, angle_output, dihedral_output,
                       res_p, prep, tile_n)
    return out[:N]


# ----------------------------- demo -----------------------------

if __name__ == "__main__":
    num_node_features, num_heads, output_dim = 16, 4, 8
    N, E, T, Q = 8, 16, 16, 16

    key = jax.random.PRNGKey(0)
    kx, kpos, kp = jax.random.split(key, 3)
    x = jax.random.normal(kx, (N, num_node_features), jnp.float32)
    pos = jax.random.normal(kpos, (N, 3), jnp.float32) * 2.0

    rng = np.random.default_rng(0)
    edge_index = jnp.asarray(
        np.stack([rng.choice(N, size=2, replace=False) for _ in range(E)], axis=1),
        dtype=jnp.int32)                                   # (2, E)
    triple_index = jnp.asarray(
        np.stack([rng.choice(N, size=3, replace=False) for _ in range(T)], axis=1),
        dtype=jnp.int32)                                   # (3, T)
    quadra_index = jnp.asarray(
        np.stack([rng.choice(N, size=4, replace=False) for _ in range(Q)], axis=1),
        dtype=jnp.int32)                                   # (4, Q)

    params = init_params(kp, num_node_features, num_heads, output_dim)
    prep = prepare_params(params, num_node_features, num_heads, output_dim)

    fwd = jax.jit(partial(ffi_layer_forward, num_heads=num_heads,
                          output_dim=output_dim))
    out = jax.block_until_ready(fwd(prep, x, edge_index, triple_index,
                                    quadra_index, pos))

    assert out.shape == (N, num_heads * output_dim)
    assert bool(jnp.all(jnp.isfinite(out)))
    print("KERNEL_OK")
</pallas_src>

<mosaic_0001>
module attributes {stable_mosaic.version = 11 : i64} {
  func.func @fused_proj_kernel(%arg0: i32, %arg1: memref<8x16xbf16, #tpu.memory_space<vmem>>, %arg2: memref<16x160xbf16, #tpu.memory_space<vmem>>, %arg3: memref<1x160xf32, #tpu.memory_space<vmem>>, %arg4: memref<8x32xf32, #tpu.memory_space<vmem>>, %arg5: memref<8x32xf32, #tpu.memory_space<vmem>>, %arg6: memref<8x32xf32, #tpu.memory_space<vmem>>, %arg7: memref<8x32xf32, #tpu.memory_space<vmem>>, %arg8: memref<8x32xf32, #tpu.memory_space<vmem>>) attributes {dimension_semantics = [#tpu.dimension_semantics<parallel>], iteration_bounds = array<i64: 1>, scalar_prefetch = 0 : i64, scratch_operands = 0 : i64, tpu.core_type = #tpu.core_type<tc>, window_params = [{transform_indices = @transform_0, window_bounds = array<i64: 8, 16>}, {pipeline_mode = #tpu.pipeline_mode<synchronous>, transform_indices = @transform_1, window_bounds = array<i64: 16, 160>}, {pipeline_mode = #tpu.pipeline_mode<synchronous>, transform_indices = @transform_2, window_bounds = array<i64: 1, 160>}, {transform_indices = @transform_3, window_bounds = array<i64: 8, 32>}, {transform_indices = @transform_4, window_bounds = array<i64: 8, 32>}, {transform_indices = @transform_5, window_bounds = array<i64: 8, 32>}, {transform_indices = @transform_6, window_bounds = array<i64: 8, 32>}, {transform_indices = @transform_7, window_bounds = array<i64: 8, 32>}]} {
    %c0 = arith.constant 0 : index
    %c0_0 = arith.constant 0 : index
    %0 = vector.load %arg1[%c0, %c0_0] : memref<8x16xbf16, #tpu.memory_space<vmem>>, vector<8x16xbf16>
    %c0_1 = arith.constant 0 : index
    %c0_2 = arith.constant 0 : index
    %1 = vector.load %arg2[%c0_1, %c0_2] : memref<16x160xbf16, #tpu.memory_space<vmem>>, vector<16x160xbf16>
    %cst = arith.constant dense<0.000000e+00> : vector<8x160xf32>
    %2 = tpu.matmul %0, %1, %cst {dimension_numbers = #tpu.dot_dimension_numbers<[1], [0], [0], [1], [0, 0, 1, 1], [], []>} : vector<8x16xbf16>, vector<16x160xbf16>, vector<8x160xf32> -> vector<8x160xf32>
    %c0_3 = arith.constant 0 : index
    %c0_4 = arith.constant 0 : index
    %3 = vector.load %arg3[%c0_3, %c0_4] : memref<1x160xf32, #tpu.memory_space<vmem>>, vector<1x160xf32>
    %4 = vector.broadcast %3 : vector<1x160xf32> to vector<8x160xf32>
    %5 = arith.addf %2, %4 : vector<8x160xf32>
    %6 = vector.extract_strided_slice %5 {offsets = [0, 0], sizes = [8, 32], strides = [1, 1]} : vector<8x160xf32> to vector<8x32xf32>
    %c0_5 = arith.constant 0 : index
    %c0_6 = arith.constant 0 : index
    %7 = vector.load %arg4[%c0_5, %c0_6] : memref<8x32xf32, #tpu.memory_space<vmem>>, vector<8x32xf32>
    tpu.vector_store %arg4[%c0_5, %c0_6], %6 {strides = array<i32>} : memref<8x32xf32, #tpu.memory_space<vmem>>, vector<8x32xf32>,
    %8 = vector.extract_strided_slice %5 {offsets = [0, 32], sizes = [8, 32], strides = [1, 1]} : vector<8x160xf32> to vector<8x32xf32>
    %c0_7 = arith.constant 0 : index
    %c0_8 = arith.constant 0 : index
    %9 = vector.load %arg5[%c0_7, %c0_8] : memref<8x32xf32, #tpu.memory_space<vmem>>, vector<8x32xf32>
    tpu.vector_store %arg5[%c0_7, %c0_8], %8 {strides = array<i32>} : memref<8x32xf32, #tpu.memory_space<vmem>>, vector<8x32xf32>,
    %10 = vector.extract_strided_slice %5 {offsets = [0, 64], sizes = [8, 32], strides = [1, 1]} : vector<8x160xf32> to vector<8x32xf32>
    %c0_9 = arith.constant 0 : index
    %c0_10 = arith.constant 0 : index
    %11 = vector.load %arg6[%c0_9, %c0_10] : memref<8x32xf32, #tpu.memory_space<vmem>>, vector<8x32xf32>
    tpu.vector_store %arg6[%c0_9, %c0_10], %10 {strides = array<i32>} : memref<8x32xf32, #tpu.memory_space<vmem>>, vector<8x32xf32>,
    %12 = vector.extract_strided_slice %5 {offsets = [0, 96], sizes = [8, 32], strides = [1, 1]} : vector<8x160xf32> to vector<8x32xf32>
    %c0_11 = arith.constant 0 : index
    %c0_12 = arith.constant 0 : index
    %13 = vector.load %arg7[%c0_11, %c0_12] : memref<8x32xf32, #tpu.memory_space<vmem>>, vector<8x32xf32>
    tpu.vector_store %arg7[%c0_11, %c0_12], %12 {strides = array<i32>} : memref<8x32xf32, #tpu.memory_space<vmem>>, vector<8x32xf32>,
    %14 = vector.extract_strided_slice %5 {offsets = [0, 128], sizes = [8, 32], strides = [1, 1]} : vector<8x160xf32> to vector<8x32xf32>
    %c0_13 = arith.constant 0 : index
    %c0_14 = arith.constant 0 : index
    %15 = vector.load %arg8[%c0_13, %c0_14] : memref<8x32xf32, #tpu.memory_space<vmem>>, vector<8x32xf32>
    tpu.vector_store %arg8[%c0_13, %c0_14], %14 {strides = array<i32>} : memref<8x32xf32, #tpu.memory_space<vmem>>, vector<8x32xf32>,
    return
  }
  func.func @transform_0(%arg0: i32) -> (i32, i32) {
    %c0_i32 = arith.constant 0 : i32
    %c0_i32_0 = arith.constant 0 : i32
    return %arg0, %c0_i32 : i32, i32
  }
  func.func @transform_1(%arg0: i32) -> (i32, i32) {
    %c0_i32 = arith.constant 0 : i32
    %c0_i32_0 = arith.constant 0 : i32
    %c0_i32_1 = arith.constant 0 : i32
    return %c0_i32, %c0_i32_0 : i32, i32
  }
  func.func @transform_2(%arg0: i32) -> (i32, i32) {
    %c0_i32 = arith.constant 0 : i32
    %c0_i32_0 = arith.constant 0 : i32
    %c0_i32_1 = arith.constant 0 : i32
    return %c0_i32, %c0_i32_0 : i32, i32
  }
  func.func @transform_3(%arg0: i32) -> (i32, i32) {
    %c0_i32 = arith.constant 0 : i32
    %c0_i32_0 = arith.constant 0 : i32
    return %arg0, %c0_i32 : i32, i32
  }
  func.func @transform_4(%arg0: i32) -> (i32, i32) {
    %c0_i32 = arith.constant 0 : i32
    %c0_i32_0 = arith.constant 0 : i32
    return %arg0, %c0_i32 : i32, i32
  }
  func.func @transform_5(%arg0: i32) -> (i32, i32) {
    %c0_i32 = arith.constant 0 : i32
    %c0_i32_0 = arith.constant 0 : i32
    return %arg0, %c0_i32 : i32, i32
  }
  func.func @transform_6(%arg0: i32) -> (i32, i32) {
    %c0_i32 = arith.constant 0 : i32
    %c0_i32_0 = arith.constant 0 : i32
    return %arg0, %c0_i32 : i32, i32
  }
  func.func @transform_7(%arg0: i32) -> (i32, i32) {
    %c0_i32 = arith.constant 0 : i32
    %c0_i32_0 = arith.constant 0 : i32
    return %arg0, %c0_i32 : i32, i32
  }
}

module attributes {stable_mosaic.version = 11 : i64} {
  func.func @hop_score_kernel(%arg0: i32, %arg1: memref<16x32xf32, #tpu.memory_space<vmem>>, %arg2: memref<16x16xf32, #tpu.memory_space<vmem>>, %arg3: memref<16x32xf32, #tpu.memory_space<vmem>>, %arg4: memref<1x32xf32, #tpu.memory_space<vmem>>, %arg5: memref<32x128xf32, #tpu.memory_space<vmem>>, %arg6: memref<16x128xf32, #tpu.memory_space<vmem>>) attributes {dimension_semantics = [#tpu.dimension_semantics<parallel>], iteration_bounds = array<i64: 1>, scalar_prefetch = 0 : i64, scratch_operands = 0 : i64, tpu.core_type = #tpu.core_type<tc>, window_params = [{transform_indices = @transform_0, window_bounds = array<i64: 16, 32>}, {transform_indices = @transform_1, window_bounds = array<i64: 16, 16>}, {pipeline_mode = #tpu.pipeline_mode<synchronous>, transform_indices = @transform_2, window_bounds = array<i64: 16, 32>}, {pipeline_mode = #tpu.pipeline_mode<synchronous>, transform_indices = @transform_3, window_bounds = array<i64: 1, 32>}, {pipeline_mode = #tpu.pipeline_mode<synchronous>, transform_indices = @transform_4, window_bounds = array<i64: 32, 128>}, {transform_indices = @transform_5, window_bounds = array<i64: 16, 128>}]} {
    %c0 = arith.constant 0 : index
    %c0_0 = arith.constant 0 : index
    %0 = vector.load %arg2[%c0, %c0_0] : memref<16x16xf32, #tpu.memory_space<vmem>>, vector<16x16xf32>
    %c0_1 = arith.constant 0 : index
    %c0_2 = arith.constant 0 : index
    %1 = vector.load %arg3[%c0_1, %c0_2] : memref<16x32xf32, #tpu.memory_space<vmem>>, vector<16x32xf32>
    %cst = arith.constant dense<0.000000e+00> : vector<16x32xf32>
    %2 = tpu.matmul %0, %1, %cst {dimension_numbers = #tpu.dot_dimension_numbers<[1], [0], [0], [1], [0, 0, 1, 1], [], []>} : vector<16x16xf32>, vector<16x32xf32>, vector<16x32xf32> -> vector<16x32xf32>
    %c0_3 = arith.constant 0 : index
    %c0_4 = arith.constant 0 : index
    %3 = vector.load %arg4[%c0_3, %c0_4] : memref<1x32xf32, #tpu.memory_space<vmem>>, vector<1x32xf32>
    %4 = vector.broadcast %3 : vector<1x32xf32> to vector<16x32xf32>
    %5 = arith.addf %2, %4 : vector<16x32xf32>
    %c0_5 = arith.constant 0 : index
    %c0_6 = arith.constant 0 : index
    %6 = vector.load %arg1[%c0_5, %c0_6] : memref<16x32xf32, #tpu.memory_space<vmem>>, vector<16x32xf32>
    %7 = arith.mulf %6, %5 : vector<16x32xf32>
    %cst_7 = arith.constant 0.000000e+00 : f32
    %8 = vector.broadcast %cst_7 : f32 to vector<16x32xf32>
    %9 = arith.cmpf oge, %7, %8 : vector<16x32xf32>
    %cst_8 = arith.constant 2.000000e-01 : f32
    %10 = vector.broadcast %cst_8 : f32 to vector<16x32xf32>
    %11 = arith.mulf %10, %7 : vector<16x32xf32>
    %12 = arith.select %9, %7, %11 : vector<16x32xi1>, vector<16x32xf32>
    %c0_9 = arith.constant 0 : index
    %c0_10 = arith.constant 0 : index
    %13 = vector.load %arg5[%c0_9, %c0_10] : memref<32x128xf32, #tpu.memory_space<vmem>>, vector<32x128xf32>
    %cst_11 = arith.constant dense<0.000000e+00> : vector<16x128xf32>
    %14 = tpu.matmul %12, %13, %cst_11 {dimension_numbers = #tpu.dot_dimension_numbers<[1], [0], [0], [1], [0, 0, 1, 1], [], []>} : vector<16x32xf32>, vector<32x128xf32>, vector<16x128xf32> -> vector<16x128xf32>
    %c0_12 = arith.constant 0 : index
    %c0_13 = arith.constant 0 : index
    %15 = vector.load %arg6[%c0_12, %c0_13] : memref<16x128xf32, #tpu.memory_space<vmem>>, vector<16x128xf32>
    tpu.vector_store %arg6[%c0_12, %c0_13], %14 {strides = array<i32>} : memref<16x128xf32, #tpu.memory_space<vmem>>, vector<16x128xf32>,
    return
  }
  func.func @transform_0(%arg0: i32) -> (i32, i32) {
    %c0_i32 = arith.constant 0 : i32
    %c0_i32_0 = arith.constant 0 : i32
    return %arg0, %c0_i32 : i32, i32
  }
  func.func @transform_1(%arg0: i32) -> (i32, i32) {
    %c0_i32 = arith.constant 0 : i32
    %c0_i32_0 = arith.constant 0 : i32
    return %arg0, %c0_i32 : i32, i32
  }
  func.func @transform_2(%arg0: i32) -> (i32, i32) {
    %c0_i32 = arith.constant 0 : i32
    %c0_i32_0 = arith.constant 0 : i32
    %c0_i32_1 = arith.constant 0 : i32
    return %c0_i32, %c0_i32_0 : i32, i32
  }
  func.func @transform_3(%arg0: i32) -> (i32, i32) {
    %c0_i32 = arith.constant 0 : i32
    %c0_i32_0 = arith.constant 0 : i32
    %c0_i32_1 = arith.constant 0 : i32
    return %c0_i32, %c0_i32_0 : i32, i32
  }
  func.func @transform_4(%arg0: i32) -> (i32, i32) {
    %c0_i32 = arith.constant 0 : i32
    %c0_i32_0 = arith.constant 0 : i32
    %c0_i32_1 = arith.constant 0 : i32
    return %c0_i32, %c0_i32_0 : i32, i32
  }
  func.func @transform_5(%arg0: i32) -> (i32, i32) {
    %c0_i32 = arith.constant 0 : i32
    %c0_i32_0 = arith.constant 0 : i32
    return %arg0, %c0_i32 : i32, i32
  }
}

module attributes {stable_mosaic.version = 11 : i64} {
  func.func @hop_score_kernel(%arg0: i32, %arg1: memref<16x32xf32, #tpu.memory_space<vmem>>, %arg2: memref<16x8xf32, #tpu.memory_space<vmem>>, %arg3: memref<8x32xf32, #tpu.memory_space<vmem>>, %arg4: memref<1x32xf32, #tpu.memory_space<vmem>>, %arg5: memref<32x128xf32, #tpu.memory_space<vmem>>, %arg6: memref<16x128xf32, #tpu.memory_space<vmem>>) attributes {dimension_semantics = [#tpu.dimension_semantics<parallel>], iteration_bounds = array<i64: 1>, scalar_prefetch = 0 : i64, scratch_operands = 0 : i64, tpu.core_type = #tpu.core_type<tc>, window_params = [{transform_indices = @transform_0, window_bounds = array<i64: 16, 32>}, {transform_indices = @transform_1, window_bounds = array<i64: 16, 8>}, {pipeline_mode = #tpu.pipeline_mode<synchronous>, transform_indices = @transform_2, window_bounds = array<i64: 8, 32>}, {pipeline_mode = #tpu.pipeline_mode<synchronous>, transform_indices = @transform_3, window_bounds = array<i64: 1, 32>}, {pipeline_mode = #tpu.pipeline_mode<synchronous>, transform_indices = @transform_4, window_bounds = array<i64: 32, 128>}, {transform_indices = @transform_5, window_bounds = array<i64: 16, 128>}]} {
    %c0 = arith.constant 0 : index
    %c0_0 = arith.constant 0 : index
    %0 = vector.load %arg2[%c0, %c0_0] : memref<16x8xf32, #tpu.memory_space<vmem>>, vector<16x8xf32>
    %c0_1 = arith.constant 0 : index
    %c0_2 = arith.constant 0 : index
    %1 = vector.load %arg3[%c0_1, %c0_2] : memref<8x32xf32, #tpu.memory_space<vmem>>, vector<8x32xf32>
    %cst = arith.constant dense<0.000000e+00> : vector<16x32xf32>
    %2 = tpu.matmul %0, %1, %cst {dimension_numbers = #tpu.dot_dimension_numbers<[1], [0], [0], [1], [0, 0, 1, 1], [], []>} : vector<16x8xf32>, vector<8x32xf32>, vector<16x32xf32> -> vector<16x32xf32>
    %c0_3 = arith.constant 0 : index
    %c0_4 = arith.constant 0 : index
    %3 = vector.load %arg4[%c0_3, %c0_4] : memref<1x32xf32, #tpu.memory_space<vmem>>, vector<1x32xf32>
    %4 = vector.broadcast %3 : vector<1x32xf32> to vector<16x32xf32>
    %5 = arith.addf %2, %4 : vector<16x32xf32>
    %c0_5 = arith.constant 0 : index
    %c0_6 = arith.constant 0 : index
    %6 = vector.load %arg1[%c0_5, %c0_6] : memref<16x32xf32, #tpu.memory_space<vmem>>, vector<16x32xf32>
    %7 = arith.mulf %6, %5 : vector<16x32xf32>
    %cst_7 = arith.constant 0.000000e+00 : f32
    %8 = vector.broadcast %cst_7 : f32 to vector<16x32xf32>
    %9 = arith.cmpf oge, %7, %8 : vector<16x32xf32>
    %cst_8 = arith.constant 2.000000e-01 : f32
    %10 = vector.broadcast %cst_8 : f32 to vector<16x32xf32>
    %11 = arith.mulf %10, %7 : vector<16x32xf32>
    %12 = arith.select %9, %7, %11 : vector<16x32xi1>, vector<16x32xf32>
    %c0_9 = arith.constant 0 : index
    %c0_10 = arith.constant 0 : index
    %13 = vector.load %arg5[%c0_9, %c0_10] : memref<32x128xf32, #tpu.memory_space<vmem>>, vector<32x128xf32>
    %cst_11 = arith.constant dense<0.000000e+00> : vector<16x128xf32>
    %14 = tpu.matmul %12, %13, %cst_11 {dimension_numbers = #tpu.dot_dimension_numbers<[1], [0], [0], [1], [0, 0, 1, 1], [], []>} : vector<16x32xf32>, vector<32x128xf32>, vector<16x128xf32> -> vector<16x128xf32>
    %c0_12 = arith.constant 0 : index
    %c0_13 = arith.constant 0 : index
    %15 = vector.load %arg6[%c0_12, %c0_13] : memref<16x128xf32, #tpu.memory_space<vmem>>, vector<16x128xf32>
    tpu.vector_store %arg6[%c0_12, %c0_13], %14 {strides = array<i32>} : memref<16x128xf32, #tpu.memory_space<vmem>>, vector<16x128xf32>,
    return
  }
  func.func @transform_0(%arg0: i32) -> (i32, i32) {
    %c0_i32 = arith.constant 0 : i32
    %c0_i32_0 = arith.constant 0 : i32
    return %arg0, %c0_i32 : i32, i32
  }
  func.func @transform_1(%arg0: i32) -> (i32, i32) {
    %c0_i32 = arith.constant 0 : i32
    %c0_i32_0 = arith.constant 0 : i32
    return %arg0, %c0_i32 : i32, i32
  }
  func.func @transform_2(%arg0: i32) -> (i32, i32) {
    %c0_i32 = arith.constant 0 : i32
    %c0_i32_0 = arith.constant 0 : i32
    %c0_i32_1 = arith.constant 0 : i32
    return %c0_i32, %c0_i32_0 : i32, i32
  }
  func.func @transform_3(%arg0: i32) -> (i32, i32) {
    %c0_i32 = arith.constant 0 : i32
    %c0_i32_0 = arith.constant 0 : i32
    %c0_i32_1 = arith.constant 0 : i32
    return %c0_i32, %c0_i32_0 : i32, i32
  }
  func.func @transform_4(%arg0: i32) -> (i32, i32) {
    %c0_i32 = arith.constant 0 : i32
    %c0_i32_0 = arith.constant 0 : i32
    %c0_i32_1 = arith.constant 0 : i32
    return %c0_i32, %c0_i32_0 : i32, i32
  }
  func.func @transform_5(%arg0: i32) -> (i32, i32) {
    %c0_i32 = arith.constant 0 : i32
    %c0_i32_0 = arith.constant 0 : i32
    return %arg0, %c0_i32 : i32, i32
  }
}

module attributes {stable_mosaic.version = 11 : i64} {
  func.func @combine_norm_kernel(%arg0: i32, %arg1: memref<8x32xf32, #tpu.memory_space<vmem>>, %arg2: memref<8x32xf32, #tpu.memory_space<vmem>>, %arg3: memref<8x32xf32, #tpu.memory_space<vmem>>, %arg4: memref<8x32xf32, #tpu.memory_space<vmem>>, %arg5: memref<8x32xf32, #tpu.memory_space<vmem>>, %arg6: memref<32x32xbf16, #tpu.memory_space<vmem>>, %arg7: memref<1x32xf32, #tpu.memory_space<vmem>>, %arg8: memref<32x32xbf16, #tpu.memory_space<vmem>>, %arg9: memref<1x32xf32, #tpu.memory_space<vmem>>, %arg10: memref<32x32xbf16, #tpu.memory_space<vmem>>, %arg11: memref<1x32xf32, #tpu.memory_space<vmem>>, %arg12: memref<32x4xf32, #tpu.memory_space<vmem>>, %arg13: memref<4x32xf32, #tpu.memory_space<vmem>>, %arg14: memref<1x32xf32, #tpu.memory_space<vmem>>, %arg15: memref<1x32xf32, #tpu.memory_space<vmem>>, %arg16: memref<1x32xf32, #tpu.memory_space<vmem>>, %arg17: memref<1xf32, #tpu.memory_space<smem>>, %arg18: memref<8x32xf32, #tpu.memory_space<vmem>>) attributes {dimension_semantics = [#tpu.dimension_semantics<parallel>], iteration_bounds = array<i64: 1>, scalar_prefetch = 0 : i64, scratch_operands = 0 : i64, tpu.core_type = #tpu.core_type<tc>, window_params = [{transform_indices = @transform_0, window_bounds = array<i64: 8, 32>}, {transform_indices = @transform_1, window_bounds = array<i64: 8, 32>}, {transform_indices = @transform_2, window_bounds = array<i64: 8, 32>}, {transform_indices = @transform_3, window_bounds = array<i64: 8, 32>}, {transform_indices = @transform_4, window_bounds = array<i64: 8, 32>}, {pipeline_mode = #tpu.pipeline_mode<synchronous>, transform_indices = @transform_5, window_bounds = array<i64: 32, 32>}, {pipeline_mode = #tpu.pipeline_mode<synchronous>, transform_indices = @transform_6, window_bounds = array<i64: 1, 32>}, {pipeline_mode = #tpu.pipeline_mode<synchronous>, transform_indices = @transform_7, window_bounds = array<i64: 32, 32>}, {pipeline_mode = #tpu.pipeline_mode<synchronous>, transform_indices = @transform_8, window_bounds = array<i64: 1, 32>}, {pipeline_mode = #tpu.pipeline_mode<synchronous>, transform_indices = @transform_9, window_bounds = array<i64: 32, 32>}, {pipeline_mode = #tpu.pipeline_mode<synchronous>, transform_indices = @transform_10, window_bounds = array<i64: 1, 32>}, {pipeline_mode = #tpu.pipeline_mode<synchronous>, transform_indices = @transform_11, window_bounds = array<i64: 32, 4>}, {pipeline_mode = #tpu.pipeline_mode<synchronous>, transform_indices = @transform_12, window_bounds = array<i64: 4, 32>}, {pipeline_mode = #tpu.pipeline_mode<synchronous>, transform_indices = @transform_13, window_bounds = array<i64: 1, 32>}, {pipeline_mode = #tpu.pipeline_mode<synchronous>, transform_indices = @transform_14, window_bounds = array<i64: 1, 32>}, {pipeline_mode = #tpu.pipeline_mode<synchronous>, transform_indices = @transform_15, window_bounds = array<i64: 1, 32>}, {transform_indices = @transform_16, window_bounds = array<i64: 1>}, {transform_indices = @transform_17, window_bounds = array<i64: 8, 32>}]} {
    %c0 = arith.constant 0 : index
    %c0_0 = arith.constant 0 : index
    %0 = vector.load %arg2[%c0, %c0_0] : memref<8x32xf32, #tpu.memory_space<vmem>>, vector<8x32xf32>
    %c0_1 = arith.constant 0 : index
    %c0_2 = arith.constant 0 : index
    %1 = vector.load %arg3[%c0_1, %c0_2] : memref<8x32xf32, #tpu.memory_space<vmem>>, vector<8x32xf32>
    %c0_3 = arith.constant 0 : index
    %c0_4 = arith.constant 0 : index
    %2 = vector.load %arg4[%c0_3, %c0_4] : memref<8x32xf32, #tpu.memory_space<vmem>>, vector<8x32xf32>
    %3 = arith.truncf %0 : vector<8x32xf32> to vector<8x32xbf16>
    %c0_5 = arith.constant 0 : index
    %c0_6 = arith.constant 0 : index
    %4 = vector.load %arg6[%c0_5, %c0_6] : memref<32x32xbf16, #tpu.memory_space<vmem>>, vector<32x32xbf16>
    %cst = arith.constant dense<0.000000e+00> : vector<8x32xf32>
    %5 = tpu.matmul %3, %4, %cst {dimension_numbers = #tpu.dot_dimension_numbers<[1], [0], [0], [1], [0, 0, 1, 1], [], []>} : vector<8x32xbf16>, vector<32x32xbf16>, vector<8x32xf32> -> vector<8x32xf32>
    %c0_7 = arith.constant 0 : index
    %c0_8 = arith.constant 0 : index
    %6 = vector.load %arg7[%c0_7, %c0_8] : memref<1x32xf32, #tpu.memory_space<vmem>>, vector<1x32xf32>
    %7 = vector.broadcast %6 : vector<1x32xf32> to vector<8x32xf32>
    %8 = arith.addf %5, %7 : vector<8x32xf32>
    %9 = arith.truncf %1 : vector<8x32xf32> to vector<8x32xbf16>
    %c0_9 = arith.constant 0 : index
    %c0_10 = arith.constant 0 : index
    %10 = vector.load %arg8[%c0_9, %c0_10] : memref<32x32xbf16, #tpu.memory_space<vmem>>, vector<32x32xbf16>
    %cst_11 = arith.constant dense<0.000000e+00> : vector<8x32xf32>
    %11 = tpu.matmul %9, %10, %cst_11 {dimension_numbers = #tpu.dot_dimension_numbers<[1], [0], [0], [1], [0, 0, 1, 1], [], []>} : vector<8x32xbf16>, vector<32x32xbf16>, vector<8x32xf32> -> vector<8x32xf32>
    %c0_12 = arith.constant 0 : index
    %c0_13 = arith.constant 0 : index
    %12 = vector.load %arg9[%c0_12, %c0_13] : memref<1x32xf32, #tpu.memory_space<vmem>>, vector<1x32xf32>
    %13 = vector.broadcast %12 : vector<1x32xf32> to vector<8x32xf32>
    %14 = arith.addf %11, %13 : vector<8x32xf32>
    %15 = arith.truncf %2 : vector<8x32xf32> to vector<8x32xbf16>
    %c0_14 = arith.constant 0 : index
    %c0_15 = arith.constant 0 : index
    %16 = vector.load %arg10[%c0_14, %c0_15] : memref<32x32xbf16, #tpu.memory_space<vmem>>, vector<32x32xbf16>
    %cst_16 = arith.constant dense<0.000000e+00> : vector<8x32xf32>
    %17 = tpu.matmul %15, %16, %cst_16 {dimension_numbers = #tpu.dot_dimension_numbers<[1], [0], [0], [1], [0, 0, 1, 1], [], []>} : vector<8x32xbf16>, vector<32x32xbf16>, vector<8x32xf32> -> vector<8x32xf32>
    %c0_17 = arith.constant 0 : index
    %c0_18 = arith.constant 0 : index
    %18 = vector.load %arg11[%c0_17, %c0_18] : memref<1x32xf32, #tpu.memory_space<vmem>>, vector<1x32xf32>
    %19 = vector.broadcast %18 : vector<1x32xf32> to vector<8x32xf32>
    %20 = arith.addf %17, %19 : vector<8x32xf32>
    %c0_19 = arith.constant 0 : index
    %c0_20 = arith.constant 0 : index
    %21 = vector.load %arg1[%c0_19, %c0_20] : memref<8x32xf32, #tpu.memory_space<vmem>>, vector<8x32xf32>
    %c0_21 = arith.constant 0 : index
    %c0_22 = arith.constant 0 : index
    %22 = vector.load %arg12[%c0_21, %c0_22] : memref<32x4xf32, #tpu.memory_space<vmem>>, vector<32x4xf32>
    %23 = arith.mulf %21, %8 : vector<8x32xf32>
    %cst_23 = arith.constant dense<0.000000e+00> : vector<8x4xf32>
    %24 = tpu.matmul %23, %22, %cst_23 {dimension_numbers = #tpu.dot_dimension_numbers<[1], [0], [0], [1], [0, 0, 1, 1], [], []>} : vector<8x32xf32>, vector<32x4xf32>, vector<8x4xf32> -> vector<8x4xf32>
    %25 = arith.mulf %21, %14 : vector<8x32xf32>
    %cst_24 = arith.constant dense<0.000000e+00> : vector<8x4xf32>
    %26 = tpu.matmul %25, %22, %cst_24 {dimension_numbers = #tpu.dot_dimension_numbers<[1], [0], [0], [1], [0, 0, 1, 1], [], []>} : vector<8x32xf32>, vector<32x4xf32>, vector<8x4xf32> -> vector<8x4xf32>
    %27 = arith.mulf %21, %20 : vector<8x32xf32>
    %cst_25 = arith.constant dense<0.000000e+00> : vector<8x4xf32>
    %28 = tpu.matmul %27, %22, %cst_25 {dimension_numbers = #tpu.dot_dimension_numbers<[1], [0], [0], [1], [0, 0, 1, 1], [], []>} : vector<8x32xf32>, vector<32x4xf32>, vector<8x4xf32> -> vector<8x4xf32>
    %29 = arith.maximumf %24, %26 : vector<8x4xf32>
    %30 = arith.maximumf %29, %28 : vector<8x4xf32>
    %31 = arith.subf %24, %30 : vector<8x4xf32>
    %32 = math.exp %31 : vector<8x4xf32>
    %33 = arith.subf %26, %30 : vector<8x4xf32>
    %34 = math.exp %33 : vector<8x4xf32>
    %35 = arith.subf %28, %30 : vector<8x4xf32>
    %36 = math.exp %35 : vector<8x4xf32>
    %37 = arith.addf %32, %34 : vector<8x4xf32>
    %38 = arith.addf %37, %36 : vector<8x4xf32>
    %39 = tpu.reciprocal %38 {approx = true} : vector<8x4xf32> -> vector<8x4xf32>
    %c0_26 = arith.constant 0 : index
    %c0_27 = arith.constant 0 : index
    %40 = vector.load %arg13[%c0_26, %c0_27] : memref<4x32xf32, #tpu.memory_space<vmem>>, vector<4x32xf32>
    %41 = arith.mulf %32, %39 : vector<8x4xf32>
    %cst_28 = arith.constant dense<0.000000e+00> : vector<8x32xf32>
    %42 = tpu.matmul %41, %40, %cst_28 {dimension_numbers = #tpu.dot_dimension_numbers<[1], [0], [0], [1], [0, 0, 1, 1], [], []>} : vector<8x4xf32>, vector<4x32xf32>, vector<8x32xf32> -> vector<8x32xf32>
    %43 = arith.mulf %34, %39 : vector<8x4xf32>
    %cst_29 = arith.constant dense<0.000000e+00> : vector<8x32xf32>
    %44 = tpu.matmul %43, %40, %cst_29 {dimension_numbers = #tpu.dot_dimension_numbers<[1], [0], [0], [1], [0, 0, 1, 1], [], []>} : vector<8x4xf32>, vector<4x32xf32>, vector<8x32xf32> -> vector<8x32xf32>
    %45 = arith.mulf %36, %39 : vector<8x4xf32>
    %cst_30 = arith.constant dense<0.000000e+00> : vector<8x32xf32>
    %46 = tpu.matmul %45, %40, %cst_30 {dimension_numbers = #tpu.dot_dimension_numbers<[1], [0], [0], [1], [0, 0, 1, 1], [], []>} : vector<8x4xf32>, vector<4x32xf32>, vector<8x32xf32> -> vector<8x32xf32>
    %47 = arith.mulf %42, %0 : vector<8x32xf32>
    %48 = arith.mulf %44, %1 : vector<8x32xf32>
    %49 = arith.addf %47, %48 : vector<8x32xf32>
    %50 = arith.mulf %46, %2 : vector<8x32xf32>
    %51 = arith.addf %49, %50 : vector<8x32xf32>
    %c0_31 = arith.constant 0 : index
    %c0_32 = arith.constant 0 : index
    %52 = vector.load %arg5[%c0_31, %c0_32] : memref<8x32xf32, #tpu.memory_space<vmem>>, vector<8x32xf32>
    %53 = arith.addf %51, %52 : vector<8x32xf32>
    %c0_33 = arith.constant 0 : index
    %c0_34 = arith.constant 0 : index
    %54 = vector.load %arg14[%c0_33, %c0_34] : memref<1x32xf32, #tpu.memory_space<vmem>>, vector<1x32xf32>
    %55 = vector.broadcast %54 : vector<1x32xf32> to vector<8x32xf32>
    %56 = arith.addf %53, %55 : vector<8x32xf32>
    %cst_35 = arith.constant dense<0.000000e+00> : vector<8xf32>
    %57 = vector.multi_reduction <add>, %56, %cst_35 [1] : vector<8x32xf32> to vector<8xf32>
    %58 = vector.shape_cast %57 : vector<8xf32> to vector<8x1xf32>
    %cst_36 = arith.constant 3.200000e+01 : f32
    %59 = vector.broadcast %cst_36 : f32 to vector<8x1xf32>
    %60 = arith.divf %58, %59 : vector<8x1xf32>
    %61 = arith.mulf %56, %56 : vector<8x32xf32>
    %cst_37 = arith.constant dense<0.000000e+00> : vector<8xf32>
    %62 = vector.multi_reduction <add>, %61, %cst_37 [1] : vector<8x32xf32> to vector<8xf32>
    %63 = vector.shape_cast %62 : vector<8xf32> to vector<8x1xf32>
    %cst_38 = arith.constant 3.200000e+01 : f32
    %64 = vector.broadcast %cst_38 : f32 to vector<8x1xf32>
    %65 = arith.divf %63, %64 : vector<8x1xf32>
    %66 = vector.broadcast %60 : vector<8x1xf32> to vector<8x32xf32>
    %67 = arith.subf %56, %66 : vector<8x32xf32>
    %68 = arith.mulf %60, %60 : vector<8x1xf32>
    %69 = arith.subf %65, %68 : vector<8x1xf32>
    %cst_39 = arith.constant 9.99999974E-6 : f32
    %70 = vector.broadcast %cst_39 : f32 to vector<8x1xf32>
    %71 = arith.addf %69, %70 : vector<8x1xf32>
    %72 = math.rsqrt %71 : vector<8x1xf32>
    %73 = vector.broadcast %72 : vector<8x1xf32> to vector<8x32xf32>
    %74 = arith.mulf %67, %73 : vector<8x32xf32>
    %c0_40 = arith.constant 0 : index
    %c0_41 = arith.constant 0 : index
    %75 = vector.load %arg15[%c0_40, %c0_41] : memref<1x32xf32, #tpu.memory_space<vmem>>, vector<1x32xf32>
    %76 = vector.broadcast %75 : vector<1x32xf32> to vector<8x32xf32>
    %77 = arith.mulf %74, %76 : vector<8x32xf32>
    %c0_42 = arith.constant 0 : index
    %c0_43 = arith.constant 0 : index
    %78 = vector.load %arg16[%c0_42, %c0_43] : memref<1x32xf32, #tpu.memory_space<vmem>>, vector<1x32xf32>
    %79 = vector.broadcast %78 : vector<1x32xf32> to vector<8x32xf32>
    %80 = arith.addf %77, %79 : vector<8x32xf32>
    %c0_44 = arith.constant 0 : index
    %81 = memref.load %arg17[%c0_44] : memref<1xf32, #tpu.memory_space<smem>>
    %cst_45 = arith.constant 0.000000e+00 : f32
    %82 = vector.broadcast %cst_45 : f32 to vector<8x32xf32>
    %83 = arith.cmpf oge, %80, %82 : vector<8x32xf32>
    %84 = vector.broadcast %81 : f32 to vector<8x32xf32>
    %85 = arith.mulf %84, %80 : vector<8x32xf32>
    %86 = arith.select %83, %80, %85 : vector<8x32xi1>, vector<8x32xf32>
    %c0_46 = arith.constant 0 : index
    %c0_47 = arith.constant 0 : index
    %87 = vector.load %arg18[%c0_46, %c0_47] : memref<8x32xf32, #tpu.memory_space<vmem>>, vector<8x32xf32>
    tpu.vector_store %arg18[%c0_46, %c0_47], %86 {strides = array<i32>} : memref<8x32xf32, #tpu.memory_space<vmem>>, vector<8x32xf32>,
    return
  }
  func.func @transform_0(%arg0: i32) -> (i32, i32) {
    %c0_i32 = arith.constant 0 : i32
    %c0_i32_0 = arith.constant 0 : i32
    return %arg0, %c0_i32 : i32, i32
  }
  func.func @transform_1(%arg0: i32) -> (i32, i32) {
    %c0_i32 = arith.constant 0 : i32
    %c0_i32_0 = arith.constant 0 : i32
    return %arg0, %c0_i32 : i32, i32
  }
  func.func @transform_2(%arg0: i32) -> (i32, i32) {
    %c0_i32 = arith.constant 0 : i32
    %c0_i32_0 = arith.constant 0 : i32
    return %arg0, %c0_i32 : i32, i32
  }
  func.func @transform_3(%arg0: i32) -> (i32, i32) {
    %c0_i32 = arith.constant 0 : i32
    %c0_i32_0 = arith.constant 0 : i32
    return %arg0, %c0_i32 : i32, i32
  }
  func.func @transform_4(%arg0: i32) -> (i32, i32) {
    %c0_i32 = arith.constant 0 : i32
    %c0_i32_0 = arith.constant 0 : i32
    return %arg0, %c0_i32 : i32, i32
  }
  func.func @transform_5(%arg0: i32) -> (i32, i32) {
    %c0_i32 = arith.constant 0 : i32
    %c0_i32_0 = arith.constant 0 : i32
    %c0_i32_1 = arith.constant 0 : i32
    return %c0_i32, %c0_i32_0 : i32, i32
  }
  func.func @transform_6(%arg0: i32) -> (i32, i32) {
    %c0_i32 = arith.constant 0 : i32
    %c0_i32_0 = arith.constant 0 : i32
    %c0_i32_1 = arith.constant 0 : i32
    return %c0_i32, %c0_i32_0 : i32, i32
  }
  func.func @transform_7(%arg0: i32) -> (i32, i32) {
    %c0_i32 = arith.constant 0 : i32
    %c0_i32_0 = arith.constant 0 : i32
    %c0_i32_1 = arith.constant 0 : i32
    return %c0_i32, %c0_i32_0 : i32, i32
  }
  func.func @transform_8(%arg0: i32) -> (i32, i32) {
    %c0_i32 = arith.constant 0 : i32
    %c0_i32_0 = arith.constant 0 : i32
    %c0_i32_1 = arith.constant 0 : i32
    return %c0_i32, %c0_i32_0 : i32, i32
  }
  func.func @transform_9(%arg0: i32) -> (i32, i32) {
    %c0_i32 = arith.constant 0 : i32
    %c0_i32_0 = arith.constant 0 : i32
    %c0_i32_1 = arith.constant 0 : i32
    return %c0_i32, %c0_i32_0 : i32, i32
  }
  func.func @transform_10(%arg0: i32) -> (i32, i32) {
    %c0_i32 = arith.constant 0 : i32
    %c0_i32_0 = arith.constant 0 : i32
    %c0_i32_1 = arith.constant 0 : i32
    return %c0_i32, %c0_i32_0 : i32, i32
  }
  func.func @transform_11(%arg0: i32) -> (i32, i32) {
    %c0_i32 = arith.constant 0 : i32
    %c0_i32_0 = arith.constant 0 : i32
    %c0_i32_1 = arith.constant 0 : i32
    return %c0_i32, %c0_i32_0 : i32, i32
  }
  func.func @transform_12(%arg0: i32) -> (i32, i32) {
    %c0_i32 = arith.constant 0 : i32
    %c0_i32_0 = arith.constant 0 : i32
    %c0_i32_1 = arith.constant 0 : i32
    return %c0_i32, %c0_i32_0 : i32, i32
  }
  func.func @transform_13(%arg0: i32) -> (i32, i32) {
    %c0_i32 = arith.constant 0 : i32
    %c0_i32_0 = arith.constant 0 : i32
    %c0_i32_1 = arith.constant 0 : i32
    return %c0_i32, %c0_i32_0 : i32, i32
  }
  func.func @transform_14(%arg0: i32) -> (i32, i32) {
    %c0_i32 = arith.constant 0 : i32
    %c0_i32_0 = arith.constant 0 : i32
    %c0_i32_1 = arith.constant 0 : i32
    return %c0_i32, %c0_i32_0 : i32, i32
  }
  func.func @transform_15(%arg0: i32) -> (i32, i32) {
    %c0_i32 = arith.constant 0 : i32
    %c0_i32_0 = arith.constant 0 : i32
    %c0_i32_1 = arith.constant 0 : i32
    return %c0_i32, %c0_i32_0 : i32, i32
  }
  func.func @transform_16(%arg0: i32) -> i32 {
    %c0_i32 = arith.constant 0 : i32
    %c0_i32_0 = arith.constant 0 : i32
    return %c0_i32 : i32
  }
  func.func @transform_17(%arg0: i32) -> (i32, i32) {
    %c0_i32 = arith.constant 0 : i32
    %c0_i32_0 = arith.constant 0 : i32
    return %arg0, %c0_i32 : i32, i32
  }
}

</mosaic_0001>

<llo_original>
// kernel: ffi_layer_forward.5
$region0: #{ffi_layer_forward.5}
  #allocation0 [shape = 'u32[]', space=smem, size = 0x4, offset = 0x4, fixed_abs, tag = 'smem constant byte address 0x4 - core index']
  #allocation1 [shape = 'u32[72,128]{1,0:T(1,128)}', space=vmem, size = 0x9000, scoped, tag = 'internal scratch']
  %s0 = inlined_call_operand.vmem [shape: bf16[8,16], index: 0, kind: input, shape index: {}]
  %s1 = inlined_call_operand.vmem [shape: bf16[16,160], index: 1, kind: input, shape index: {}]
  %s2 = inlined_call_operand.vmem [shape: f32[1,160], index: 2, kind: input, shape index: {}]
  %s3 = inlined_call_operand.vmem [shape: f32[8,32], index: 3, kind: output, shape index: {0}]
  %s4 = inlined_call_operand.vmem [shape: f32[8,32], index: 4, kind: output, shape index: {1}]
  %s5 = inlined_call_operand.vmem [shape: f32[8,32], index: 5, kind: output, shape index: {2}]
  %s6 = inlined_call_operand.vmem [shape: f32[8,32], index: 6, kind: output, shape index: {3}]
  %s7 = inlined_call_operand.vmem [shape: f32[8,32], index: 7, kind: output, shape index: {4}]
  %8 = xla_tuple %s3, %s4, %s5, %s6, %s7
  %s9 = sld [smem:[#allocation0]]
  $region54: #{ffi_layer_forward.5} parent=0
    _
  %s11 = ssub.s32 1, %s9
  %s12 = scalar_select 0, %s11, %s9
  // Predicated region
  $region2: #{ffi_layer_forward.5} parent=0 // pred_check
    _
  $region3: #{ffi_layer_forward.5} parent=0 // pred_check_branch
    %14 = sbr.rel (0) target = $region5
  $region4: #{ffi_layer_forward.5} parent=0 // pred_region
    _
  $region5: #{ffi_layer_forward.5} parent=0 // pred_fallthru
    _
  // Predicated region
  $region6: #{ffi_layer_forward.5} parent=0 // pred_check
    _
  $region7: #{ffi_layer_forward.5} parent=0 // pred_check_branch
    %16 = sbr.rel (0) target = $region9
  $region8: #{ffi_layer_forward.5} parent=0 // pred_region
    _
  $region9: #{ffi_layer_forward.5} parent=0 // pred_fallthru
    _
  // Predicated region
  $region10: #{ffi_layer_forward.5} parent=0 // pred_check
    _
  $region11: #{ffi_layer_forward.5} parent=0 // pred_check_branch
    %18 = sbr.rel (0) target = $region13
  $region12: #{ffi_layer_forward.5} parent=0 // pred_region
    _
  $region13: #{ffi_layer_forward.5} parent=0 // pred_fallthru
    _
  %v20 = vld [vmem:[%s0] sm:$0xf]
  %v21 = vld [vmem:[%s1] sm:$0xff]
  %v22 = vld [vmem:[%s1 + $0x8] sm:$0xff]
  %v23 = vld [vmem:[%s2] sm:$0x3]
  %v25 = vperm.slane %v23, 0
  %v26 = vperm.slane %v23, 1
  %v31 = vunpack.c.l.b16 %v21
  %v32 = vunpack.c.h.b16 %v21
  %v33 = vunpack.c.l.b16 %v22
  %v34 = vunpack.c.h.b16 %v22
  %v35 = vpack.c.b16 %v33, %v31
  %v36 = vpack.c.b16 %v34, %v32
  %vm39 = vcmask 130048
  %v41 = vsel %vm39, %v20, 0
  %43 = vmatpush.bf16.msra.mxu0 0
  %44 = vmatpush.bf16.msra.mxu0 0
  %45 = vmatpush.bf16.msra.mxu0 0
  %46 = vmatpush.bf16.msra.mxu0 0
  %47 = vmatpush.bf16.msra.mxu0 0
  %48 = vmatpush.bf16.msra.mxu0 0
  %49 = vmatpush.bf16.msra.mxu0 0
  %50 = vmatpush.bf16.msra.mxu0 %v35
  %51 = vmatmul.bf16.gmra.mxu0 %v41
  %v52 = vpop.f32.mrf.mxu0
  %v53 = vadd.f32 %v25, %v52
  %v54 = vpop.f32.mrf.mxu0
  %55 = vdwg.mxu0
  %56 = vmatpush.bf16.msra.mxu0 0
  %57 = vmatpush.bf16.msra.mxu0 0
  %58 = vmatpush.bf16.msra.mxu0 0
  %59 = vmatpush.bf16.msra.mxu0 0
  %60 = vmatpush.bf16.msra.mxu0 0
  %61 = vmatpush.bf16.msra.mxu0 0
  %62 = vmatpush.bf16.msra.mxu0 0
  %63 = vmatpush.bf16.msra.mxu0 %v36
  %64 = vmatmul.bf16.gmra.mxu0 %v41
  %v65 = vpop.f32.mrf.mxu0
  %v66 = vadd.f32 %v26, %v65
  %v67 = vpop.f32.mrf.mxu0
  %68 = vdwg.mxu0
  %vm69 = vcmask 261120
  %70 = vst.msk [vmem:[%s3] sm:$0xff] %vm69, %v53
  %72 = vrot.lane.b32.xlu0 %v53, 96
  %v73 = vpop.permute.xlu0 %72
  %75 = vst.msk [vmem:[%s4] sm:$0xff] %vm69, %v73
  %76 = vrot.lane.b32.xlu0 %v53, 64
  %v77 = vpop.permute.xlu0 %76
  %79 = vst.msk [vmem:[%s5] sm:$0xff] %vm69, %v77
  %80 = vrot.lane.b32.xlu0 %v53, 32
  %v81 = vpop.permute.xlu0 %80
  %83 = vst.msk [vmem:[%s6] sm:$0xff] %vm69, %v81
  %84 = vst.msk [vmem:[%s7] sm:$0xff] %vm69, %v66
  // Predicated region
  $region14: #{ffi_layer_forward.5} parent=0 // pred_check
    _
  $region15: #{ffi_layer_forward.5} parent=0 // pred_check_branch
    %86 = sbr.rel (0) target = $region17
  $region16: #{ffi_layer_forward.5} parent=0 // pred_region
    _
  $region17: #{ffi_layer_forward.5} parent=0 // pred_fallthru
    _
  // Predicated region
  $region18: #{ffi_layer_forward.5} parent=0 // pred_check
    _
  $region19: #{ffi_layer_forward.5} parent=0 // pred_check_branch
    %88 = sbr.rel (0) target = $region21
  $region20: #{ffi_layer_forward.5} parent=0 // pred_region
    _
  $region21: #{ffi_layer_forward.5} parent=0 // pred_fallthru
    _
  // Predicated region
  $region22: #{ffi_layer_forward.5} parent=0 // pred_check
    _
  $region23: #{ffi_layer_forward.5} parent=0 // pred_check_branch
    %90 = sbr.rel (0) target = $region25
  $region24: #{ffi_layer_forward.5} parent=0 // pred_region
    _
  $region25: #{ffi_layer_forward.5} parent=0 // pred_fallthru
    _
  // Predicated region
  $region26: #{ffi_layer_forward.5} parent=0 // pred_check
    _
  $region27: #{ffi_layer_forward.5} parent=0 // pred_check_branch
    %92 = sbr.rel (0) target = $region29
  $region28: #{ffi_layer_forward.5} parent=0 // pred_region
    _
  $region29: #{ffi_layer_forward.5} parent=0 // pred_fallthru
    _
  // Predicated region
  $region30: #{ffi_layer_forward.5} parent=0 // pred_check
    _
  $region31: #{ffi_layer_forward.5} parent=0 // pred_check_branch
    %94 = sbr.rel (0) target = $region33
  $region32: #{ffi_layer_forward.5} parent=0 // pred_region
    _
  $region33: #{ffi_layer_forward.5} parent=0 // pred_fallthru
    _
  // Predicated region
  $region34: #{ffi_layer_forward.5} parent=0 // pred_check
    _
  $region35: #{ffi_layer_forward.5} parent=0 // pred_check_branch
    %96 = sbr.rel (0) target = $region37
  $region36: #{ffi_layer_forward.5} parent=0 // pred_region
    _
  $region37: #{ffi_layer_forward.5} parent=0 // pred_fallthru
    _
  // Predicated region
  $region38: #{ffi_layer_forward.5} parent=0 // pred_check
    _
  $region39: #{ffi_layer_forward.5} parent=0 // pred_check_branch
    %98 = sbr.rel (0) target = $region41
  $region40: #{ffi_layer_forward.5} parent=0 // pred_region
    _
  $region41: #{ffi_layer_forward.5} parent=0 // pred_fallthru
    _
  // Predicated region
  $region42: #{ffi_layer_forward.5} parent=0 // pred_check
    _
  $region43: #{ffi_layer_forward.5} parent=0 // pred_check_branch
    %100 = sbr.rel (0) target = $region45
  $region44: #{ffi_layer_forward.5} parent=0 // pred_region
    _
  $region45: #{ffi_layer_forward.5} parent=0 // pred_fallthru
    _
  // Predicated region
  $region46: #{ffi_layer_forward.5} parent=0 // pred_check
    _
  $region47: #{ffi_layer_forward.5} parent=0 // pred_check_branch
    %102 = sbr.rel (0) target = $region49
  $region48: #{ffi_layer_forward.5} parent=0 // pred_region
    _
  $region49: #{ffi_layer_forward.5} parent=0 // pred_fallthru
    _
  // Predicated region
  $region50: #{ffi_layer_forward.5} parent=0 // pred_check
    _
  $region51: #{ffi_layer_forward.5} parent=0 // pred_check_branch
    %104 = sbr.rel (0) target = $region53
  $region52: #{ffi_layer_forward.5} parent=0 // pred_region
    _
  $region53: #{ffi_layer_forward.5} parent=0 // pred_fallthru
    _

// kernel: ffi_layer_forward.8
$region0: #{ffi_layer_forward.8}
  #allocation0 [shape = 'u32[]', space=smem, size = 0x4, offset = 0x4, fixed_abs, tag = 'smem constant byte address 0x4 - core index']
  #allocation1 [shape = 'u32[72,128]{1,0:T(1,128)}', space=vmem, size = 0x9000, scoped, tag = 'internal scratch']
  %s0 = inlined_call_operand.vmem [shape: f32[16,32], index: 0, kind: input, shape index: {}]
  %s1 = inlined_call_operand.vmem [shape: f32[16,16], index: 1, kind: input, shape index: {}]
  %s2 = inlined_call_operand.vmem [shape: f32[16,32], index: 2, kind: input, shape index: {}]
  %s3 = inlined_call_operand.vmem [shape: f32[1,32], index: 3, kind: input, shape index: {}]
  %s4 = inlined_call_operand.vmem [shape: f32[32,128], index: 4, kind: input, shape index: {}]
  %s5 = inlined_call_operand.vmem [shape: f32[16,128], index: 5, kind: output, shape index: {}]
  %s6 = sld [smem:[#allocation0]]
  $region30: #{ffi_layer_forward.8} parent=0
    _
  %s8 = ssub.s32 1, %s6
  %s9 = scalar_select 0, %s8, %s6
  // Predicated region
  $region2: #{ffi_layer_forward.8} parent=0 // pred_check
    _
  $region3: #{ffi_layer_forward.8} parent=0 // pred_check_branch
    %11 = sbr.rel (0) target = $region5
  $region4: #{ffi_layer_forward.8} parent=0 // pred_region
    _
  $region5: #{ffi_layer_forward.8} parent=0 // pred_fallthru
    _
  // Predicated region
  $region6: #{ffi_layer_forward.8} parent=0 // pred_check
    _
  $region7: #{ffi_layer_forward.8} parent=0 // pred_check_branch
    %13 = sbr.rel (0) target = $region9
  $region8: #{ffi_layer_forward.8} parent=0 // pred_region
    _
  $region9: #{ffi_layer_forward.8} parent=0 // pred_fallthru
    _
  // Predicated region
  $region10: #{ffi_layer_forward.8} parent=0 // pred_check
    _
  $region11: #{ffi_layer_forward.8} parent=0 // pred_check_branch
    %15 = sbr.rel (0) target = $region13
  $region12: #{ffi_layer_forward.8} parent=0 // pred_region
    _
  $region13: #{ffi_layer_forward.8} parent=0 // pred_fallthru
    _
  // Predicated region
  $region14: #{ffi_layer_forward.8} parent=0 // pred_check
    _
  $region15: #{ffi_layer_forward.8} parent=0 // pred_check_branch
    %17 = sbr.rel (0) target = $region17
  $region16: #{ffi_layer_forward.8} parent=0 // pred_region
    _
  $region17: #{ffi_layer_forward.8} parent=0 // pred_fallthru
    _
  // Predicated region
  $region18: #{ffi_layer_forward.8} parent=0 // pred_check
    _
  $region19: #{ffi_layer_forward.8} parent=0 // pred_check_branch
    %19 = sbr.rel (0) target = $region21
  $region20: #{ffi_layer_forward.8} parent=0 // pred_region
    _
  $region21: #{ffi_layer_forward.8} parent=0 // pred_fallthru
    _
  %v20 = vld [vmem:[%s1] sm:$0xff]
  %v21 = vld [vmem:[%s1 + $0x8] sm:$0xff]
  %v22 = vld [vmem:[%s2] sm:$0xff]
  %v23 = vld [vmem:[%s2 + $0x8] sm:$0xff]
  %v24 = vld [vmem:[%s3] sm:$0x1]
  %v26 = vperm.slane %v24, 0
  %vm28 = vcmask 130048
  %v30 = vsel %vm28, %v20, 0
  %v33 = vsel %vm28, %v21, 0
  %35 = vmatpush.msra.mxu0 0.0
  %36 = vmatpush.msra.mxu0 0.0
  %37 = vmatpush.msra.mxu0 0.0
  %38 = vmatpush.msra.mxu0 0.0
  %39 = vmatpush.msra.mxu0 0.0
  %40 = vmatpush.msra.mxu0 0.0
  %41 = vmatpush.msra.mxu0 0.0
  %42 = vmatpush.msra.mxu0 0.0
  %43 = vmatpush.msra.mxu0 0.0
  %44 = vmatpush.msra.mxu0 0.0
  %45 = vmatpush.msra.mxu0 0.0
  %46 = vmatpush.msra.mxu0 0.0
  %47 = vmatpush.msra.mxu0 0.0
  %48 = vmatpush.msra.mxu0 0.0
  %49 = vmatpush.msra.mxu0 %v23
  %50 = vmatpush.msra.mxu0 %v22
  %51 = vmatmul.f32.gmra.mxu0 %v30
  %v52 = vpop.f32.mrf.mxu0
  %v53 = vadd.f32 %v26, %v52
  %54 = vmatmul.f32.gmra.mxu0 %v33
  %v55 = vpop.f32.mrf.mxu0
  %v56 = vadd.f32 %v26, %v55
  %57 = vdwg.mxu0
  %v58 = vld [vmem:[%s0] sm:$0xff]
  %v59 = vld [vmem:[%s0 + $0x8] sm:$0xff]
  %v60 = vmul.f32 %v58, %v53
  %v61 = vmul.f32 %v59, %v56
  %vm62 = vcmp.ge.f32.partialorder %v60, 0.0
  %vm63 = vcmp.ge.f32.partialorder %v61, 0.0
  %v64 = vmul.f32 %v60, 0.2
  %v65 = vmul.f32 %v61, 0.2
  %v66 = vsel %vm62, %v60, %v64
  %v67 = vsel %vm63, %v61, %v65
  %v68 = vld [vmem:[%s4] sm:$0xff]
  %v69 = vld [vmem:[%s4 + $0x8] sm:$0xff]
  %v70 = vld [vmem:[%s4 + $0x10] sm:$0xff]
  %v71 = vld [vmem:[%s4 + $0x18] sm:$0xff]
  %vm72 = vcmask 261120
  %v74 = vsel %vm72, %v66, 0
  %v77 = vsel %vm72, %v67, 0
  %79 = vmatpush.msra.mxu0 0.0
  %80 = vmatpush.msra.mxu0 0.0
  %81 = vmatpush.msra.mxu0 0.0
  %82 = vmatpush.msra.mxu0 0.0
  %83 = vmatpush.msra.mxu0 0.0
  %84 = vmatpush.msra.mxu0 0.0
  %85 = vmatpush.msra.mxu0 0.0
  %86 = vmatpush.msra.mxu0 0.0
  %87 = vmatpush.msra.mxu0 0.0
  %88 = vmatpush.msra.mxu0 0.0
  %89 = vmatpush.msra.mxu0 0.0
  %90 = vmatpush.msra.mxu0 0.0
  %91 = vmatpush.msra.mxu0 %v71
  %92 = vmatpush.msra.mxu0 %v70
  %93 = vmatpush.msra.mxu0 %v69
  %94 = vmatpush.msra.mxu0 %v68
  %95 = vmatmul.f32.gmra.mxu0 %v74
  %v96 = vpop.f32.mrf.mxu0
  %v97 = vadd.f32 0.0, %v96
  %98 = vmatmul.f32.gmra.mxu0 %v77
  %v99 = vpop.f32.mrf.mxu0
  %v100 = vadd.f32 0.0, %v99
  %101 = vdwg.mxu0
  %102 = vst [vmem:[%s5] sm:$0xff] %v97
  %103 = vst [vmem:[%s5 + $0x8] sm:$0xff] %v100
  // Predicated region
  $region22: #{ffi_layer_forward.8} parent=0 // pred_check
    _
  $region23: #{ffi_layer_forward.8} parent=0 // pred_check_branch
    %105 = sbr.rel (0) target = $region25
  $region24: #{ffi_layer_forward.8} parent=0 // pred_region
    _
  $region25: #{ffi_layer_forward.8} parent=0 // pred_fallthru
    _
  // Predicated region
  $region26: #{ffi_layer_forward.8} parent=0 // pred_check
    _
  $region27: #{ffi_layer_forward.8} parent=0 // pred_check_branch
    %107 = sbr.rel (0) target = $region29
  $region28: #{ffi_layer_forward.8} parent=0 // pred_region
    _
  $region29: #{ffi_layer_forward.8} parent=0 // pred_fallthru
    _

// kernel: ffi_layer_forward.7
$region0: #{ffi_layer_forward.7}
  #allocation0 [shape = 'u32[]', space=smem, size = 0x4, offset = 0x4, fixed_abs, tag = 'smem constant byte address 0x4 - core index']
  #allocation1 [shape = 'u32[72,128]{1,0:T(1,128)}', space=vmem, size = 0x9000, scoped, tag = 'internal scratch']
  %s0 = inlined_call_operand.vmem [shape: f32[16,32], index: 0, kind: input, shape index: {}]
  %s1 = inlined_call_operand.vmem [shape: f32[16,8], index: 1, kind: input, shape index: {}]
  %s2 = inlined_call_operand.vmem [shape: f32[8,32], index: 2, kind: input, shape index: {}]
  %s3 = inlined_call_operand.vmem [shape: f32[1,32], index: 3, kind: input, shape index: {}]
  %s4 = inlined_call_operand.vmem [shape: f32[32,128], index: 4, kind: input, shape index: {}]
  %s5 = inlined_call_operand.vmem [shape: f32[16,128], index: 5, kind: output, shape index: {}]
  %s6 = sld [smem:[#allocation0]]
  $region30: #{ffi_layer_forward.7} parent=0
    _
  %s8 = ssub.s32 1, %s6
  %s9 = scalar_select 0, %s8, %s6
  // Predicated region
  $region2: #{ffi_layer_forward.7} parent=0 // pred_check
    _
  $region3: #{ffi_layer_forward.7} parent=0 // pred_check_branch
    %11 = sbr.rel (0) target = $region5
  $region4: #{ffi_layer_forward.7} parent=0 // pred_region
    _
  $region5: #{ffi_layer_forward.7} parent=0 // pred_fallthru
    _
  // Predicated region
  $region6: #{ffi_layer_forward.7} parent=0 // pred_check
    _
  $region7: #{ffi_layer_forward.7} parent=0 // pred_check_branch
    %13 = sbr.rel (0) target = $region9
  $region8: #{ffi_layer_forward.7} parent=0 // pred_region
    _
  $region9: #{ffi_layer_forward.7} parent=0 // pred_fallthru
    _
  // Predicated region
  $region10: #{ffi_layer_forward.7} parent=0 // pred_check
    _
  $region11: #{ffi_layer_forward.7} parent=0 // pred_check_branch
    %15 = sbr.rel (0) target = $region13
  $region12: #{ffi_layer_forward.7} parent=0 // pred_region
    _
  $region13: #{ffi_layer_forward.7} parent=0 // pred_fallthru
    _
  // Predicated region
  $region14: #{ffi_layer_forward.7} parent=0 // pred_check
    _
  $region15: #{ffi_layer_forward.7} parent=0 // pred_check_branch
    %17 = sbr.rel (0) target = $region17
  $region16: #{ffi_layer_forward.7} parent=0 // pred_region
    _
  $region17: #{ffi_layer_forward.7} parent=0 // pred_fallthru
    _
  // Predicated region
  $region18: #{ffi_layer_forward.7} parent=0 // pred_check
    _
  $region19: #{ffi_layer_forward.7} parent=0 // pred_check_branch
    %19 = sbr.rel (0) target = $region21
  $region20: #{ffi_layer_forward.7} parent=0 // pred_region
    _
  $region21: #{ffi_layer_forward.7} parent=0 // pred_fallthru
    _
  %v20 = vld [vmem:[%s1] sm:$0xff]
  %v21 = vld [vmem:[%s1 + $0x8] sm:$0xff]
  %v22 = vld [vmem:[%s2] sm:$0xff]
  %v23 = vld [vmem:[%s3] sm:$0x1]
  %v25 = vperm.slane %v23, 0
  %vm27 = vcmask 64512
  %v29 = vsel %vm27, %v20, 0
  %v32 = vsel %vm27, %v21, 0
  %34 = vmatpush.msra.mxu0 0.0
  %35 = vmatpush.msra.mxu0 0.0
  %36 = vmatpush.msra.mxu0 0.0
  %37 = vmatpush.msra.mxu0 0.0
  %38 = vmatpush.msra.mxu0 0.0
  %39 = vmatpush.msra.mxu0 0.0
  %40 = vmatpush.msra.mxu0 0.0
  %41 = vmatpush.msra.mxu0 0.0
  %42 = vmatpush.msra.mxu0 0.0
  %43 = vmatpush.msra.mxu0 0.0
  %44 = vmatpush.msra.mxu0 0.0
  %45 = vmatpush.msra.mxu0 0.0
  %46 = vmatpush.msra.mxu0 0.0
  %47 = vmatpush.msra.mxu0 0.0
  %48 = vmatpush.msra.mxu0 0.0
  %49 = vmatpush.msra.mxu0 %v22
  %50 = vmatmul.f32.gmra.mxu0 %v29
  %v51 = vpop.f32.mrf.mxu0
  %v52 = vadd.f32 %v25, %v51
  %53 = vmatmul.f32.gmra.mxu0 %v32
  %v54 = vpop.f32.mrf.mxu0
  %v55 = vadd.f32 %v25, %v54
  %56 = vdwg.mxu0
  %v57 = vld [vmem:[%s0] sm:$0xff]
  %v58 = vld [vmem:[%s0 + $0x8] sm:$0xff]
  %v59 = vmul.f32 %v57, %v52
  %v60 = vmul.f32 %v58, %v55
  %vm61 = vcmp.ge.f32.partialorder %v59, 0.0
  %vm62 = vcmp.ge.f32.partialorder %v60, 0.0
  %v63 = vmul.f32 %v59, 0.2
  %v64 = vmul.f32 %v60, 0.2
  %v65 = vsel %vm61, %v59, %v63
  %v66 = vsel %vm62, %v60, %v64
  %v67 = vld [vmem:[%s4] sm:$0xff]
  %v68 = vld [vmem:[%s4 + $0x8] sm:$0xff]
  %v69 = vld [vmem:[%s4 + $0x10] sm:$0xff]
  %v70 = vld [vmem:[%s4 + $0x18] sm:$0xff]
  %vm71 = vcmask 261120
  %v73 = vsel %vm71, %v65, 0
  %v76 = vsel %vm71, %v66, 0
  %78 = vmatpush.msra.mxu0 0.0
  %79 = vmatpush.msra.mxu0 0.0
  %80 = vmatpush.msra.mxu0 0.0
  %81 = vmatpush.msra.mxu0 0.0
  %82 = vmatpush.msra.mxu0 0.0
  %83 = vmatpush.msra.mxu0 0.0
  %84 = vmatpush.msra.mxu0 0.0
  %85 = vmatpush.msra.mxu0 0.0
  %86 = vmatpush.msra.mxu0 0.0
  %87 = vmatpush.msra.mxu0 0.0
  %88 = vmatpush.msra.mxu0 0.0
  %89 = vmatpush.msra.mxu0 0.0
  %90 = vmatpush.msra.mxu0 %v70
  %91 = vmatpush.msra.mxu0 %v69
  %92 = vmatpush.msra.mxu0 %v68
  %93 = vmatpush.msra.mxu0 %v67
  %94 = vmatmul.f32.gmra.mxu0 %v73
  %v95 = vpop.f32.mrf.mxu0
  %v96 = vadd.f32 0.0, %v95
  %97 = vmatmul.f32.gmra.mxu0 %v76
  %v98 = vpop.f32.mrf.mxu0
  %v99 = vadd.f32 0.0, %v98
  %100 = vdwg.mxu0
  %101 = vst [vmem:[%s5] sm:$0xff] %v96
  %102 = vst [vmem:[%s5 + $0x8] sm:$0xff] %v99
  // Predicated region
  $region22: #{ffi_layer_forward.7} parent=0 // pred_check
    _
  $region23: #{ffi_layer_forward.7} parent=0 // pred_check_branch
    %104 = sbr.rel (0) target = $region25
  $region24: #{ffi_layer_forward.7} parent=0 // pred_region
    _
  $region25: #{ffi_layer_forward.7} parent=0 // pred_fallthru
    _
  // Predicated region
  $region26: #{ffi_layer_forward.7} parent=0 // pred_check
    _
  $region27: #{ffi_layer_forward.7} parent=0 // pred_check_branch
    %106 = sbr.rel (0) target = $region29
  $region28: #{ffi_layer_forward.7} parent=0 // pred_region
    _
  $region29: #{ffi_layer_forward.7} parent=0 // pred_fallthru
    _

// kernel: ffi_layer_forward.9
$region0: #{ffi_layer_forward.9}
  #allocation0 [shape = 'u32[]', space=smem, size = 0x4, offset = 0x4, fixed_abs, tag = 'smem constant byte address 0x4 - core index']
  #allocation1 [shape = 'u32[72,128]{1,0:T(1,128)}', space=vmem, size = 0x9000, scoped, tag = 'internal scratch']
  #allocation2 [shape = 'f32[1]{0:T(128)S(6)}', space=smem, size = 0x200, scoped, tag = 'scoped memory for ffi_layer_forward.9']
  %s0 = inlined_call_operand.vmem [shape: f32[8,32], index: 0, kind: input, shape index: {}]
  %s1 = inlined_call_operand.vmem [shape: f32[8,32], index: 1, kind: input, shape index: {}]
  %s2 = inlined_call_operand.vmem [shape: f32[8,32], index: 2, kind: input, shape index: {}]
  %s3 = inlined_call_operand.vmem [shape: f32[8,32], index: 3, kind: input, shape index: {}]
  %s4 = inlined_call_operand.vmem [shape: f32[8,32], index: 4, kind: input, shape index: {}]
  %s5 = inlined_call_operand.vmem [shape: bf16[32,32], index: 5, kind: input, shape index: {}]
  %s6 = inlined_call_operand.vmem [shape: f32[1,32], index: 6, kind: input, shape index: {}]
  %s7 = inlined_call_operand.vmem [shape: bf16[32,32], index: 7, kind: input, shape index: {}]
  %s8 = inlined_call_operand.vmem [shape: f32[1,32], index: 8, kind: input, shape index: {}]
  %s9 = inlined_call_operand.vmem [shape: bf16[32,32], index: 9, kind: input, shape index: {}]
  %s10 = inlined_call_operand.vmem [shape: f32[1,32], index: 10, kind: input, shape index: {}]
  %s11 = inlined_call_operand.vmem [shape: f32[32,4], index: 11, kind: input, shape index: {}]
  %s12 = inlined_call_operand.vmem [shape: f32[4,32], index: 12, kind: input, shape index: {}]
  %s13 = inlined_call_operand.vmem [shape: f32[1,32], index: 13, kind: input, shape index: {}]
  %s14 = inlined_call_operand.vmem [shape: f32[1,32], index: 14, kind: input, shape index: {}]
  %s15 = inlined_call_operand.vmem [shape: f32[1,32], index: 15, kind: input, shape index: {}]
  %s16 = inlined_call_operand.<no memory space> [shape: f32[1], index: 16, kind: input, shape index: {}]
  %s17 = inlined_call_operand.hbm [shape: f32[8,32], index: 17, kind: output, shape index: {}]
  %s18 = sld [smem:[#allocation0]]
  $region78: #{ffi_layer_forward.9} parent=0
    _
  %s20 = ssub.s32 1, %s18
  %s21 = scalar_select 0, %s20, %s18
  %22 = sst [smem:[#allocation2]] %s16
  $region1: #{ffi_layer_forward.9} parent=0
    #allocation3 [shape = 'u8[4096]{0}', space=vmem, size = 0x1000, scoped, tag = 'output window, operand 0, single buffered']
    #allocation4 [shape = 's32[1]{0}', space=sflag, size = 0x4, scoped, tag = 'scoped memory for ffi_layer_forward.9']
    %23 = vsyncpa [#allocation4], 0
    // Predicated region
    $region2: #{ffi_layer_forward.9} parent=1 // pred_check
      _
    $region3: #{ffi_layer_forward.9} parent=1 // pred_check_branch
      %25 = sbr.rel (0) target = $region5
    $region4: #{ffi_layer_forward.9} parent=1 // pred_region
      _
    $region5: #{ffi_layer_forward.9} parent=1 // pred_fallthru
      _
    // Predicated region
    $region6: #{ffi_layer_forward.9} parent=1 // pred_check
      _
    $region7: #{ffi_layer_forward.9} parent=1 // pred_check_branch
      %27 = sbr.rel (0) target = $region9
    $region8: #{ffi_layer_forward.9} parent=1 // pred_region
      _
    $region9: #{ffi_layer_forward.9} parent=1 // pred_fallthru
      _
    // Predicated region
    $region10: #{ffi_layer_forward.9} parent=1 // pred_check
      _
    $region11: #{ffi_layer_forward.9} parent=1 // pred_check_branch
      %29 = sbr.rel (0) target = $region13
    $region12: #{ffi_layer_forward.9} parent=1 // pred_region
      _
    $region13: #{ffi_layer_forward.9} parent=1 // pred_fallthru
      _
    // Predicated region
    $region14: #{ffi_layer_forward.9} parent=1 // pred_check
      _
    $region15: #{ffi_layer_forward.9} parent=1 // pred_check_branch
      %31 = sbr.rel (0) target = $region17
    $region16: #{ffi_layer_forward.9} parent=1 // pred_region
      _
    $region17: #{ffi_layer_forward.9} parent=1 // pred_fallthru
      _
    // Predicated region
    $region18: #{ffi_layer_forward.9} parent=1 // pred_check
      _
    $region19: #{ffi_layer_forward.9} parent=1 // pred_check_branch
      %33 = sbr.rel (0) target = $region21
    $region20: #{ffi_layer_forward.9} parent=1 // pred_region
      _
    $region21: #{ffi_layer_forward.9} parent=1 // pred_fallthru
      _
    // Predicated region
    $region22: #{ffi_layer_forward.9} parent=1 // pred_check
      _
    $region23: #{ffi_layer_forward.9} parent=1 // pred_check_branch
      %35 = sbr.rel (0) target = $region25
    $region24: #{ffi_layer_forward.9} parent=1 // pred_region
      _
    $region25: #{ffi_layer_forward.9} parent=1 // pred_fallthru
      _
    // Predicated region
    $region26: #{ffi_layer_forward.9} parent=1 // pred_check
      _
    $region27: #{ffi_layer_forward.9} parent=1 // pred_check_branch
      %37 = sbr.rel (0) target = $region29
    $region28: #{ffi_layer_forward.9} parent=1 // pred_region
      _
    $region29: #{ffi_layer_forward.9} parent=1 // pred_fallthru
      _
    // Predicated region
    $region30: #{ffi_layer_forward.9} parent=1 // pred_check
      _
    $region31: #{ffi_layer_forward.9} parent=1 // pred_check_branch
      %39 = sbr.rel (0) target = $region33
    $region32: #{ffi_layer_forward.9} parent=1 // pred_region
      _
    $region33: #{ffi_layer_forward.9} parent=1 // pred_fallthru
      _
    // Predicated region
    $region34: #{ffi_layer_forward.9} parent=1 // pred_check
      _
    $region35: #{ffi_layer_forward.9} parent=1 // pred_check_branch
      %41 = sbr.rel (0) target = $region37
    $region36: #{ffi_layer_forward.9} parent=1 // pred_region
      _
    $region37: #{ffi_layer_forward.9} parent=1 // pred_fallthru
      _
    // Predicated region
    $region38: #{ffi_layer_forward.9} parent=1 // pred_check
      _
    $region39: #{ffi_layer_forward.9} parent=1 // pred_check_branch
      %43 = sbr.rel (0) target = $region41
    $region40: #{ffi_layer_forward.9} parent=1 // pred_region
      _
    $region41: #{ffi_layer_forward.9} parent=1 // pred_fallthru
      _
    // Predicated region
    $region42: #{ffi_layer_forward.9} parent=1 // pred_check
      _
    $region43: #{ffi_layer_forward.9} parent=1 // pred_check_branch
      %45 = sbr.rel (0) target = $region45
    $region44: #{ffi_layer_forward.9} parent=1 // pred_region
      _
    $region45: #{ffi_layer_forward.9} parent=1 // pred_fallthru
      _
    // Predicated region
    $region46: #{ffi_layer_forward.9} parent=1 // pred_check
      _
    $region47: #{ffi_layer_forward.9} parent=1 // pred_check_branch
      %47 = sbr.rel (0) target = $region49
    $region48: #{ffi_layer_forward.9} parent=1 // pred_region
      _
    $region49: #{ffi_layer_forward.9} parent=1 // pred_fallthru
      _
    // Predicated region
    $region50: #{ffi_layer_forward.9} parent=1 // pred_check
      _
    $region51: #{ffi_layer_forward.9} parent=1 // pred_check_branch
      %49 = sbr.rel (0) target = $region53
    $region52: #{ffi_layer_forward.9} parent=1 // pred_region
      _
    $region53: #{ffi_layer_forward.9} parent=1 // pred_fallthru
      _
    // Predicated region
    $region54: #{ffi_layer_forward.9} parent=1 // pred_check
      _
    $region55: #{ffi_layer_forward.9} parent=1 // pred_check_branch
      %51 = sbr.rel (0) target = $region57
    $region56: #{ffi_layer_forward.9} parent=1 // pred_region
      _
    $region57: #{ffi_layer_forward.9} parent=1 // pred_fallthru
      _
    // Predicated region
    $region58: #{ffi_layer_forward.9} parent=1 // pred_check
      _
    $region59: #{ffi_layer_forward.9} parent=1 // pred_check_branch
      %53 = sbr.rel (0) target = $region61
    $region60: #{ffi_layer_forward.9} parent=1 // pred_region
      _
    $region61: #{ffi_layer_forward.9} parent=1 // pred_fallthru
      _
    // Predicated region
    $region62: #{ffi_layer_forward.9} parent=1 // pred_check
      _
    $region63: #{ffi_layer_forward.9} parent=1 // pred_check_branch
      %55 = sbr.rel (0) target = $region65
    $region64: #{ffi_layer_forward.9} parent=1 // pred_region
      _
    $region65: #{ffi_layer_forward.9} parent=1 // pred_fallthru
      _
    // Predicated region
    $region66: #{ffi_layer_forward.9} parent=1 // pred_check
      _
    $region67: #{ffi_layer_forward.9} parent=1 // pred_check_branch
      %57 = sbr.rel (0) target = $region69
    $region68: #{ffi_layer_forward.9} parent=1 // pred_region
      _
    $region69: #{ffi_layer_forward.9} parent=1 // pred_fallthru
      _
    %v59 = vld [vmem:[%s1] sm:$0xff]
    %v60 = vld [vmem:[%s2] sm:$0xff]
    %v61 = vld [vmem:[%s3] sm:$0xff]
    %v62 = vpack.c.bf16 %v59, %v59
    %v63 = vld [vmem:[%s5] sm:$0xf]
    %v64 = vld [vmem:[%s5 + $0x4] sm:$0xf]
    %v65 = vld [vmem:[%s5 + $0x8] sm:$0xf]
    %v66 = vld [vmem:[%s5 + $0xc] sm:$0xf]
    %v67 = vld [vmem:[%s6] sm:$0x1]
    %v69 = vperm.slane %v67, 0
    %v75 = vunpack.c.l.b16 %v63
    %v76 = vunpack.c.l.b16 %v64
    %v77 = vunpack.c.l.b16 %v65
    %v78 = vunpack.c.l.b16 %v66
    %v79 = vpack.c.b16 %v76, %v75
    %v80 = vpack.c.b16 %v78, %v77
    %vm83 = vcmask 261120
    %v85 = vsel %vm83, %v62, 0
    %87 = vmatpush.bf16.msra.mxu0 0
    %88 = vmatpush.bf16.msra.mxu0 0
    %89 = vmatpush.bf16.msra.mxu0 0
    %90 = vmatpush.bf16.msra.mxu0 0
    %91 = vmatpush.bf16.msra.mxu0 0
    %92 = vmatpush.bf16.msra.mxu0 0
    %93 = vmatpush.bf16.msra.mxu0 %v80
    %94 = vmatpush.bf16.msra.mxu0 %v79
    %95 = vmatmul.bf16.gmra.mxu0 %v85
    %v96 = vpop.f32.mrf.mxu0
    %v97 = vadd.f32 %v69, %v96
    %v98 = vpop.f32.mrf.mxu0
    %99 = vdwg.mxu0
    %v100 = vpack.c.bf16 %v60, %v60
    %v101 = vld [vmem:[%s7] sm:$0xf]
    %v102 = vld [vmem:[%s7 + $0x4] sm:$0xf]
    %v103 = vld [vmem:[%s7 + $0x8] sm:$0xf]
    %v104 = vld [vmem:[%s7 + $0xc] sm:$0xf]
    %v105 = vld [vmem:[%s8] sm:$0x1]
    %v107 = vperm.slane %v105, 0
    %v113 = vunpack.c.l.b16 %v101
    %v114 = vunpack.c.l.b16 %v102
    %v115 = vunpack.c.l.b16 %v103
    %v116 = vunpack.c.l.b16 %v104
    %v117 = vpack.c.b16 %v114, %v113
    %v118 = vpack.c.b16 %v116, %v115
    %v122 = vsel %vm83, %v100, 0
    %124 = vmatpush.bf16.msra.mxu0 0
    %125 = vmatpush.bf16.msra.mxu0 0
    %126 = vmatpush.bf16.msra.mxu0 0
    %127 = vmatpush.bf16.msra.mxu0 0
    %128 = vmatpush.bf16.msra.mxu0 0
    %129 = vmatpush.bf16.msra.mxu0 0
    %130 = vmatpush.bf16.msra.mxu0 %v118
    %131 = vmatpush.bf16.msra.mxu0 %v117
    %132 = vmatmul.bf16.gmra.mxu0 %v122
    %v133 = vpop.f32.mrf.mxu0
    %v134 = vadd.f32 %v107, %v133
    %v135 = vpop.f32.mrf.mxu0
    %136 = vdwg.mxu0
    %v137 = vpack.c.bf16 %v61, %v61
    %v138 = vld [vmem:[%s9] sm:$0xf]
    %v139 = vld [vmem:[%s9 + $0x4] sm:$0xf]
    %v140 = vld [vmem:[%s9 + $0x8] sm:$0xf]
    %v141 = vld [vmem:[%s9 + $0xc] sm:$0xf]
    %v142 = vld [vmem:[%s10] sm:$0x1]
    %v144 = vperm.slane %v142, 0
    %v150 = vunpack.c.l.b16 %v138
    %v151 = vunpack.c.l.b16 %v139
    %v152 = vunpack.c.l.b16 %v140
    %v153 = vunpack.c.l.b16 %v141
    %v154 = vpack.c.b16 %v151, %v150
    %v155 = vpack.c.b16 %v153, %v152
    %v159 = vsel %vm83, %v137, 0
    %161 = vmatpush.bf16.msra.mxu0 0
    %162 = vmatpush.bf16.msra.mxu0 0
    %163 = vmatpush.bf16.msra.mxu0 0
    %164 = vmatpush.bf16.msra.mxu0 0
    %165 = vmatpush.bf16.msra.mxu0 0
    %166 = vmatpush.bf16.msra.mxu0 0
    %167 = vmatpush.bf16.msra.mxu0 %v155
    %168 = vmatpush.bf16.msra.mxu0 %v154
    %169 = vmatmul.bf16.gmra.mxu0 %v159
    %v170 = vpop.f32.mrf.mxu0
    %v171 = vadd.f32 %v144, %v170
    %v172 = vpop.f32.mrf.mxu0
    %173 = vdwg.mxu0
    %v174 = vld [vmem:[%s0] sm:$0xff]
    %v175 = vld [vmem:[%s11] sm:$0xff]
    %v176 = vld [vmem:[%s11 + $0x8] sm:$0xff]
    %v177 = vld [vmem:[%s11 + $0x10] sm:$0xff]
    %v178 = vld [vmem:[%s11 + $0x18] sm:$0xff]
    %v179 = vmul.f32 %v174, %v97
    %v181 = vsel %vm83, %v179, 0
    %183 = vmatpush.msra.mxu0 0.0
    %184 = vmatpush.msra.mxu0 0.0
    %185 = vmatpush.msra.mxu0 0.0
    %186 = vmatpush.msra.mxu0 0.0
    %187 = vmatpush.msra.mxu0 0.0
    %188 = vmatpush.msra.mxu0 0.0
    %189 = vmatpush.msra.mxu0 0.0
    %190 = vmatpush.msra.mxu0 0.0
    %191 = vmatpush.msra.mxu0 0.0
    %192 = vmatpush.msra.mxu0 0.0
    %193 = vmatpush.msra.mxu0 0.0
    %194 = vmatpush.msra.mxu0 0.0
    %195 = vmatpush.msra.mxu0 %v178
    %196 = vmatpush.msra.mxu0 %v177
    %197 = vmatpush.msra.mxu0 %v176
    %198 = vmatpush.msra.mxu0 %v175
    %199 = vmatmul.f32.gmra.mxu0 %v181
    %v200 = vpop.f32.mrf.mxu0
    %v201 = vadd.f32 0.0, %v200
    %202 = vdwg.mxu0
    %v203 = vmul.f32 %v174, %v134
    %v205 = vsel %vm83, %v203, 0
    %207 = vmatpush.msra.mxu0 0.0
    %208 = vmatpush.msra.mxu0 0.0
    %209 = vmatpush.msra.mxu0 0.0
    %210 = vmatpush.msra.mxu0 0.0
    %211 = vmatpush.msra.mxu0 0.0
    %212 = vmatpush.msra.mxu0 0.0
    %213 = vmatpush.msra.mxu0 0.0
    %214 = vmatpush.msra.mxu0 0.0
    %215 = vmatpush.msra.mxu0 0.0
    %216 = vmatpush.msra.mxu0 0.0
    %217 = vmatpush.msra.mxu0 0.0
    %218 = vmatpush.msra.mxu0 0.0
    %219 = vmatpush.msra.mxu0 %v178
    %220 = vmatpush.msra.mxu0 %v177
    %221 = vmatpush.msra.mxu0 %v176
    %222 = vmatpush.msra.mxu0 %v175
    %223 = vmatmul.f32.gmra.mxu0 %v205
    %v224 = vpop.f32.mrf.mxu0
    %v225 = vadd.f32 0.0, %v224
    %226 = vdwg.mxu0
    %v227 = vmul.f32 %v174, %v171
    %v229 = vsel %vm83, %v227, 0
    %231 = vmatpush.msra.mxu0 0.0
    %232 = vmatpush.msra.mxu0 0.0
    %233 = vmatpush.msra.mxu0 0.0
    %234 = vmatpush.msra.mxu0 0.0
    %235 = vmatpush.msra.mxu0 0.0
    %236 = vmatpush.msra.mxu0 0.0
    %237 = vmatpush.msra.mxu0 0.0
    %238 = vmatpush.msra.mxu0 0.0
    %239 = vmatpush.msra.mxu0 0.0
    %240 = vmatpush.msra.mxu0 0.0
    %241 = vmatpush.msra.mxu0 0.0
    %242 = vmatpush.msra.mxu0 0.0
    %243 = vmatpush.msra.mxu0 %v178
    %244 = vmatpush.msra.mxu0 %v177
    %245 = vmatpush.msra.mxu0 %v176
    %246 = vmatpush.msra.mxu0 %v175
    %247 = vmatmul.f32.gmra.mxu0 %v229
    %v248 = vpop.f32.mrf.mxu0
    %v249 = vadd.f32 0.0, %v248
    %250 = vdwg.mxu0
    %v251 = vmax.f32 %v201, %v225
    %v252 = vmax.f32 %v251, %v249
    %v253 = vsub.f32 %v201, %v252
    %v254 = vmul.f32 %v253, 1.442695
    %v255 = vpow.pop %v254
    %v256 = vsub.f32 %v225, %v252
    %v257 = vmul.f32 %v256, 1.442695
    %v258 = vpow.pop %v257
    %v259 = vsub.f32 %v249, %v252
    %v260 = vmul.f32 %v259, 1.442695
    %v261 = vpow.pop %v260
    %v262 = vadd.f32 %v255, %v258
    %v263 = vadd.f32 %v262, %v261
    %v264 = vrcp.pop %v263
    %v265 = vld [vmem:[%s12] sm:$0xf]
    %v266 = vmul.f32 %v255, %v264
    %vm267 = vcmask 31744
    %v269 = vsel %vm267, %v266, 0
    %vm271 = vcmask 1043456
    %v273 = vsel %vm271, %v265, 0
    %275 = vmatpush.msra.mxu0 0.0
    %276 = vmatpush.msra.mxu0 0.0
    %277 = vmatpush.msra.mxu0 0.0
    %278 = vmatpush.msra.mxu0 0.0
    %279 = vmatpush.msra.mxu0 0.0
    %280 = vmatpush.msra.mxu0 0.0
    %281 = vmatpush.msra.mxu0 0.0
    %282 = vmatpush.msra.mxu0 0.0
    %283 = vmatpush.msra.mxu0 0.0
    %284 = vmatpush.msra.mxu0 0.0
    %285 = vmatpush.msra.mxu0 0.0
    %286 = vmatpush.msra.mxu0 0.0
    %287 = vmatpush.msra.mxu0 0.0
    %288 = vmatpush.msra.mxu0 0.0
    %289 = vmatpush.msra.mxu0 0.0
    %290 = vmatpush.msra.mxu0 %v273
    %291 = vmatmul.f32.gmra.mxu0 %v269
    %v292 = vpop.f32.mrf.mxu0
    %v293 = vadd.f32 0.0, %v292
    %294 = vdwg.mxu0
    %v295 = vmul.f32 %v258, %v264
    %v297 = vsel %vm267, %v295, 0
    %299 = vmatpush.msra.mxu0 0.0
    %300 = vmatpush.msra.mxu0 0.0
    %301 = vmatpush.msra.mxu0 0.0
    %302 = vmatpush.msra.mxu0 0.0
    %303 = vmatpush.msra.mxu0 0.0
    %304 = vmatpush.msra.mxu0 0.0
    %305 = vmatpush.msra.mxu0 0.0
    %306 = vmatpush.msra.mxu0 0.0
    %307 = vmatpush.msra.mxu0 0.0
    %308 = vmatpush.msra.mxu0 0.0
    %309 = vmatpush.msra.mxu0 0.0
    %310 = vmatpush.msra.mxu0 0.0
    %311 = vmatpush.msra.mxu0 0.0
    %312 = vmatpush.msra.mxu0 0.0
    %313 = vmatpush.msra.mxu0 0.0
    %314 = vmatpush.msra.mxu0 %v273
    %315 = vmatmul.f32.gmra.mxu0 %v297
    %v316 = vpop.f32.mrf.mxu0
    %v317 = vadd.f32 0.0, %v316
    %318 = vdwg.mxu0
    %v319 = vmul.f32 %v261, %v264
    %v321 = vsel %vm267, %v319, 0
    %323 = vmatpush.msra.mxu0 0.0
    %324 = vmatpush.msra.mxu0 0.0
    %325 = vmatpush.msra.mxu0 0.0
    %326 = vmatpush.msra.mxu0 0.0
    %327 = vmatpush.msra.mxu0 0.0
    %328 = vmatpush.msra.mxu0 0.0
    %329 = vmatpush.msra.mxu0 0.0
    %330 = vmatpush.msra.mxu0 0.0
    %331 = vmatpush.msra.mxu0 0.0
    %332 = vmatpush.msra.mxu0 0.0
    %333 = vmatpush.msra.mxu0 0.0
    %334 = vmatpush.msra.mxu0 0.0
    %335 = vmatpush.msra.mxu0 0.0
    %336 = vmatpush.msra.mxu0 0.0
    %337 = vmatpush.msra.mxu0 0.0
    %338 = vmatpush.msra.mxu0 %v273
    %339 = vmatmul.f32.gmra.mxu0 %v321
    %v340 = vpop.f32.mrf.mxu0
    %v341 = vadd.f32 0.0, %v340
    %342 = vdwg.mxu0
    %v343 = vmul.f32 %v293, %v59
    %v344 = vmul.f32 %v317, %v60
    %v345 = vadd.f32 %v343, %v344
    %v346 = vmul.f32 %v341, %v61
    %v347 = vadd.f32 %v345, %v346
    %v348 = vld [vmem:[%s4] sm:$0xff]
    %v349 = vadd.f32 %v347, %v348
    %v350 = vld [vmem:[%s13] sm:$0x1]
    %v352 = vperm.slane %v350, 0
    %v354 = vadd.f32 %v349, %v352
    %v355 = vsel %vm83, %v354, 0.0
    %356 = vadd.xlane.f32.xlu0 %v355
    %v357 = vpop.xlane.xlu0 %356
    %v358 = vrcp.pop 32.0
    %v359 = vmul.f32 32.0, %v358
    %v360 = vsub.f32 1.0, %v359
    %v361 = vmul.f32 %v358, %v360
    %v362 = vadd.f32 %v358, %v361
    %vm363 = vweird.f32 %v358
    %v364 = vsel %vm363, %v358, %v362
    %v365 = vmul.f32 %v357, %v364
    %v366 = vmul.f32 %v354, %v354
    %v367 = vsel %vm83, %v366, 0.0
    %368 = vadd.xlane.f32.xlu0 %v367
    %v369 = vpop.xlane.xlu0 %368
    %v370 = vmul.f32 %v369, %v364
    %v371 = vsub.f32 %v354, %v365
    %v372 = vmul.f32 %v365, %v365
    %v373 = vsub.f32 %v370, %v372
    %v374 = vadd.f32 %v373, 1e-05
    %v375 = vrsqrt.pop %v374
    %v376 = vmul.f32 %v375, %v374
    %v377 = vmul.f32 %v376, %v375
    %v378 = vmul.f32 0.5, %v377
    %v379 = vsub.f32 1.5, %v378
    %v380 = vmul.f32 %v375, %v379
    %vm381 = vweird.f32 %v374
    %vm382 = vweird.f32 %v375
    %vm383 = vmor %vm381, %vm382
    %v384 = vsel %vm383, %v375, %v380
    %v385 = vmul.f32 %v371, %v384
    %v386 = vld [vmem:[%s14] sm:$0x1]
    %v388 = vperm.slane %v386, 0
    %v390 = vmul.f32 %v385, %v388
    %v391 = vld [vmem:[%s15] sm:$0x1]
    %v393 = vperm.slane %v391, 0
    %v395 = vadd.f32 %v390, %v393
    %s396 = sld [smem:[#allocation2]]
    %vm397 = vcmp.ge.f32.partialorder %v395, 0.0
    %v398 = vstv %s396
    %v399 = vmul.f32 %v398, %v395
    %v400 = vsel %vm397, %v395, %v399
    %401 = vst.msk [vmem:[#allocation3] sm:$0xff] %vm83, %v400
    // Predicated region
    $region70: #{ffi_layer_forward.9} parent=1 // pred_check
      _
    $region71: #{ffi_layer_forward.9} parent=1 // pred_check_branch
      %403 = sbr.rel (0) target = $region73
    $region72: #{ffi_layer_forward.9} parent=1 // pred_region
      %405 = vsyncadd [#allocation4], 0
      %s407 = sshll.u32 [#allocation3], 4
      %s408 = int_to_ptr.vmem [resolvable:$true] %s407
      %s409 = sshll.u32 %s17, 4
      %s410 = int_to_ptr.hbm [resolvable:$true] %s409
      %412 = dma.vmem_to_hbm [thread:$0]  %s408, 128, %s410, [#allocation4]
    $region73: #{ffi_layer_forward.9} parent=1 // pred_fallthru
      _
    // Predicated region
    $region74: #{ffi_layer_forward.9} parent=1 // pred_check
      _
    $region75: #{ffi_layer_forward.9} parent=1 // pred_check_branch
      %414 = sbr.rel (0) target = $region77
    $region76: #{ffi_layer_forward.9} parent=1 // pred_region
      %416 = dma.done [#allocation4], 128
    $region77: #{ffi_layer_forward.9} parent=1 // pred_fallthru
      _
    %417 = vsyncpa [#allocation4], 1

</llo_original>
